<compile_context>
chip_gen: v7x
topology: tpu7x:2x2x1
jax: 0.10.0
libtpu: 0.0.40
codegen_flags: <defaults>
</compile_context>

<pallas_src>
import jax
import jax.numpy as jnp
from jax.experimental import pallas as pl
from jax.experimental.pallas import tpu as pltpu


def _round_up(v, m):
    return ((v + m - 1) // m) * m


def _default_vmem_budget():
    """VMEM budget (bytes) for sizing the batch tile: ~75% of physical VMEM."""
    try:
        cap = pltpu.get_tpu_info().vmem_capacity_bytes   # 64 MiB v7x, 128 MiB v5e/v6e
    except Exception:
        cap = 64 * 2**20                                  # conservative fallback (v7x)
    return min(int(cap * 0.75), 96 * 2**20)


def _derive_batch_tile(B, N, D, wf_cols, out_cols, vmem_budget_bytes):
    """Largest tb that (a) divides B, (b) is a multiple of 8 (sublane-dense out
    block), (c) fits the VMEM budget with double-buffered x/mask/out blocks plus
    the f32 intermediates, and (d) leaves >= 2 grid steps when possible."""
    per_b = 2 * (N * D * 2)          # x block, bf16, double-buffered
    per_b += 2 * (N * 4)             # mask block, f32, double-buffered
    per_b += 2 * (out_cols * 4)      # out block, f32, double-buffered
    per_b += N * wf_cols * 4         # fused MXU result (f32 intermediate)
    per_b += 2 * N * D * 4           # emb / g intermediates (f32)
    weights = (D * wf_cols + D * out_cols) * 2
    budget = int(vmem_budget_bytes * 0.75) - 2 * weights
    target = max(8, budget // per_b)

    cands = [t for t in range(8, B + 1, 8) if B % t == 0]
    if not cands:
        return B                      # tiny / odd batch: one whole-batch tile
    # Prefer >= 2 grid steps (pipelining + v7x 2-TC sharding) when a mult-of-8
    # tile still fits in half the batch.
    pool = [t for t in cands if t <= max(B // 2, 8)] or cands
    fitting = [t for t in pool if t <= target]
    return max(fitting) if fitting else min(pool)


def _readout_kernel(x_ref, mask_ref, wf_ref, wmlp_ref, out_ref):
    # x_ref: (tb*N, D) bf16; mask_ref: (tb, N, 1) f32
    # wf_ref: (D, wf_cols) bf16  (cols [0:D] = W_emb, col D = w_att, rest zero)
    # wmlp_ref: (D, out_cols) bf16; out_ref: (tb, out_cols) f32
    tb, N, _ = mask_ref.shape
    D = x_ref.shape[1]
    Wf = wf_ref.shape[1]

    # One fused MXU pass, bf16 operands -> f32 accumulation.
    fused = jnp.dot(x_ref[...], wf_ref[...],
                    preferred_element_type=jnp.float32)        # (tb*N, Wf)
    fused = fused.reshape(tb, N, Wf)                           # leading-dim split only

    emb = jnp.maximum(fused[:, :, :D], 0.0)                    # (tb, N, D)
    att = jax.nn.sigmoid(fused[:, :, D:D + 1])                 # (tb, N, 1)

    mask = mask_ref[...]                                       # (tb, N, 1)
    n = jnp.sum(mask, axis=1)                                  # (tb, 1)
    neg = (mask - 1.0) * 1e9                                   # (tb, N, 1)

    g = mask * att * emb                                       # (tb, N, D)
    # NOTE: n == 0 (an all-masked graph) produces inf/nan, exactly like the
    # PyTorch module; callers must provide at least one valid node per element.
    g_mean = jnp.sum(g, axis=1) / n                            # (tb, D), exact divide
    g_max = jnp.max(g + neg, axis=1)                           # (tb, D)
    g_out = g_mean + g_max                                     # (tb, D) f32

    # Tile-wide output MLP; lane-dense (tb, out_cols) f32 store.
    out_ref[...] = jnp.dot(g_out.astype(wmlp_ref.dtype), wmlp_ref[...],
                           preferred_element_type=jnp.float32)


def readout_layer(x, mask, w_att, w_emb, w_mlp, *, vmem_budget_bytes=None):
    """x: (B, N, D), mask: (B, N, 1), w_att: (D, 1), w_emb: (D, D), w_mlp: (D, Dout).

    Weights are (in, out), i.e. already transposed relative to nn.Linear.weight.
    Pass bf16 activations when possible to avoid a wrapper-side cast of x.
    """
    B, N, D = x.shape
    Dout = w_mlp.shape[1]
    if vmem_budget_bytes is None:
        vmem_budget_bytes = _default_vmem_budget()

    wf_cols = _round_up(D + 1, 128)    # lane-dense fused-projection width
    out_cols = _round_up(Dout, 128)    # lane-dense output width

    # Fused [W_emb | w_att | 0...] weight and padded W_mlp, both bf16 for the MXU.
    w_fused = jnp.zeros((D, wf_cols), jnp.bfloat16)
    w_fused = w_fused.at[:, :D].set(w_emb.astype(jnp.bfloat16))
    w_fused = w_fused.at[:, D].set(w_att[:, 0].astype(jnp.bfloat16))
    w_mlp_p = jnp.zeros((D, out_cols), jnp.bfloat16)
    w_mlp_p = w_mlp_p.at[:, :Dout].set(w_mlp.astype(jnp.bfloat16))

    x2 = x.astype(jnp.bfloat16).reshape(B * N, D)   # free reshape; cast is a no-op for bf16 x
    mask = mask.astype(jnp.float32)

    tb = _derive_batch_tile(B, N, D, wf_cols, out_cols, vmem_budget_bytes)
    grid = (B // tb,)

    def run(single_buffer_weights):
        w_kwargs = dict(pipeline_mode=pl.Buffered(1)) if single_buffer_weights else {}
        in_specs = [
            pl.BlockSpec((tb * N, D), lambda b: (b, 0)),          # x tile (2-D, matmul-ready)
            pl.BlockSpec((tb, N, 1), lambda b: (b, 0, 0)),        # mask tile
            pl.BlockSpec((D, wf_cols), lambda b: (0, 0), **w_kwargs),   # fused [W_emb|W_att]
            pl.BlockSpec((D, out_cols), lambda b: (0, 0), **w_kwargs),  # W_mlp (padded)
        ]
        return pl.pallas_call(
            _readout_kernel,
            out_shape=jax.ShapeDtypeStruct((B, out_cols), jnp.float32),
            grid_spec=pltpu.PrefetchScalarGridSpec(
                num_scalar_prefetch=0,
                grid=grid,
                in_specs=in_specs,
                out_specs=pl.BlockSpec((tb, out_cols), lambda b: (b, 0)),
            ),
            compiler_params=pltpu.CompilerParams(
                # TODO(synk): verify the 1-D "parallel" axis shards across v7x's
                # 2 TensorCores; if not, switch this axis to pltpu.CORE_PARALLEL.
                dimension_semantics=("parallel",),
                vmem_limit_bytes=int(vmem_budget_bytes),
            ),
        )(x2, mask, w_fused, w_mlp_p)

    try:
        out = run(True)        # single-buffered weights (constant index_map)
    except Exception:
        out = run(False)       # fallback if pipeline_mode=Buffered(1) is unsupported
    return out[:, :Dout]


def _xavier_uniform(key, fan_in, fan_out):
    limit = (6.0 / (fan_in + fan_out)) ** 0.5
    # Returns (fan_in, fan_out), i.e. already transposed for x @ W.
    return jax.random.uniform(key, (fan_in, fan_out), jnp.float32, -limit, limit)


def _reference(x, mask, w_att, w_emb, w_mlp):
    """f32 reference of the PyTorch forward over the same bf16-rounded operands
    the kernel consumes (so the check validates kernel logic, not dtype policy)."""
    hp = jax.lax.Precision.HIGHEST
    f32 = jnp.float32
    xq = x.astype(jnp.bfloat16).astype(f32)
    wa = w_att.astype(jnp.bfloat16).astype(f32)
    we = w_emb.astype(jnp.bfloat16).astype(f32)
    wm = w_mlp.astype(jnp.bfloat16).astype(f32)
    mask = mask.astype(f32)

    att = jax.nn.sigmoid(jnp.einsum("bnd,do->bno", xq, wa, precision=hp))
    emb = jnp.maximum(jnp.einsum("bnd,de->bne", xq, we, precision=hp), 0.0)
    n = jnp.sum(mask, axis=1)
    m = (mask - 1.0) * 1e9
    g = mask * att * emb
    g = jnp.sum(g, axis=1) / n + jnp.max(g + m, axis=1)
    gq = g.astype(jnp.bfloat16).astype(f32)          # kernel feeds the MLP in bf16
    return jnp.einsum("bd,do->bo", gq, wm, precision=hp)


if __name__ == "__main__":
    B, N, D, Dout = 16, 8, 32, 16
    key = jax.random.PRNGKey(0)
    k_x, k_m, k_a, k_e, k_o = jax.random.split(key, 5)

    x = jax.random.normal(k_x, (B, N, D), jnp.float32)
    mask = (jax.random.uniform(k_m, (B, N, 1)) > 0.3).astype(jnp.float32)
    mask = mask.at[:, 0, :].set(1.0)  # guarantee at least one valid node per element

    w_att = _xavier_uniform(k_a, D, 1)
    w_emb = _xavier_uniform(k_e, D, D)
    w_mlp = _xavier_uniform(k_o, D, Dout)

    # Hand the kernel bf16 activations (what an upstream layer would produce),
    # so the wrapper's bf16 cast is a no-op and HBM sees half the x bytes.
    x_bf16 = x.astype(jnp.bfloat16)

    out = readout_layer(x_bf16, mask, w_att, w_emb, w_mlp)
    out = jax.block_until_ready(out)

    ref = _reference(x_bf16, mask, w_att, w_emb, w_mlp)
    assert out.shape == (B, Dout)
    assert jnp.allclose(out, ref, atol=5e-3, rtol=5e-3), "mismatch vs JAX reference"

    print("KERNEL_OK")
</pallas_src>

<mosaic_0001>
module attributes {stable_mosaic.version = 11 : i64} {
  func.func @_readout_kernel(%arg0: i32, %arg1: memref<64x32xbf16, #tpu.memory_space<vmem>>, %arg2: memref<8x8x1xf32, #tpu.memory_space<vmem>>, %arg3: memref<32x128xbf16, #tpu.memory_space<vmem>>, %arg4: memref<32x128xbf16, #tpu.memory_space<vmem>>, %arg5: memref<8x128xf32, #tpu.memory_space<vmem>>) attributes {dimension_semantics = [#tpu.dimension_semantics<parallel>], iteration_bounds = array<i64: 2>, scalar_prefetch = 0 : i64, scratch_operands = 0 : i64, tpu.core_type = #tpu.core_type<tc>, window_params = [{transform_indices = @transform_0, window_bounds = array<i64: 64, 32>}, {transform_indices = @transform_1, window_bounds = array<i64: 8, 8, 1>}, {pipeline_mode = #tpu.pipeline_mode<synchronous>, transform_indices = @transform_2, window_bounds = array<i64: 32, 128>}, {pipeline_mode = #tpu.pipeline_mode<synchronous>, transform_indices = @transform_3, window_bounds = array<i64: 32, 128>}, {transform_indices = @transform_4, window_bounds = array<i64: 8, 128>}]} {
    %c0 = arith.constant 0 : index
    %c0_0 = arith.constant 0 : index
    %0 = vector.load %arg1[%c0, %c0_0] : memref<64x32xbf16, #tpu.memory_space<vmem>>, vector<64x32xbf16>
    %c0_1 = arith.constant 0 : index
    %c0_2 = arith.constant 0 : index
    %1 = vector.load %arg3[%c0_1, %c0_2] : memref<32x128xbf16, #tpu.memory_space<vmem>>, vector<32x128xbf16>
    %cst = arith.constant dense<0.000000e+00> : vector<64x128xf32>
    %2 = tpu.matmul %0, %1, %cst {dimension_numbers = #tpu.dot_dimension_numbers<[1], [0], [0], [1], [0, 0, 1, 1], [], []>} : vector<64x32xbf16>, vector<32x128xbf16>, vector<64x128xf32> -> vector<64x128xf32>
    %3 = vector.shape_cast %2 : vector<64x128xf32> to vector<8x8x128xf32>
    %4 = vector.extract_strided_slice %3 {offsets = [0, 0, 0], sizes = [8, 8, 32], strides = [1, 1, 1]} : vector<8x8x128xf32> to vector<8x8x32xf32>
    %cst_3 = arith.constant 0.000000e+00 : f32
    %5 = vector.broadcast %cst_3 : f32 to vector<8x8x32xf32>
    %6 = arith.maximumf %4, %5 : vector<8x8x32xf32>
    %7 = vector.extract_strided_slice %3 {offsets = [0, 0, 32], sizes = [8, 8, 1], strides = [1, 1, 1]} : vector<8x8x128xf32> to vector<8x8x1xf32>
    %8 = arith.negf %7 : vector<8x8x1xf32>
    %9 = math.exp %8 : vector<8x8x1xf32>
    %cst_4 = arith.constant 1.000000e+00 : f32
    %10 = vector.broadcast %cst_4 : f32 to vector<8x8x1xf32>
    %11 = arith.addf %10, %9 : vector<8x8x1xf32>
    %12 = arith.divf %10, %11 : vector<8x8x1xf32>
    %c0_5 = arith.constant 0 : index
    %c0_6 = arith.constant 0 : index
    %c0_7 = arith.constant 0 : index
    %13 = vector.load %arg2[%c0_5, %c0_6, %c0_7] : memref<8x8x1xf32, #tpu.memory_space<vmem>>, vector<8x8x1xf32>
    %cst_8 = arith.constant dense<0.000000e+00> : vector<8x1xf32>
    %14 = vector.multi_reduction <add>, %13, %cst_8 [1] : vector<8x8x1xf32> to vector<8x1xf32>
    %cst_9 = arith.constant 1.000000e+00 : f32
    %15 = vector.broadcast %cst_9 : f32 to vector<8x8x1xf32>
    %16 = arith.subf %13, %15 : vector<8x8x1xf32>
    %cst_10 = arith.constant 1.000000e+09 : f32
    %17 = vector.broadcast %cst_10 : f32 to vector<8x8x1xf32>
    %18 = arith.mulf %16, %17 : vector<8x8x1xf32>
    %19 = arith.mulf %13, %12 : vector<8x8x1xf32>
    %20 = vector.broadcast %19 : vector<8x8x1xf32> to vector<8x8x32xf32>
    %21 = arith.mulf %20, %6 : vector<8x8x32xf32>
    %cst_11 = arith.constant dense<0.000000e+00> : vector<8x32xf32>
    %22 = vector.multi_reduction <add>, %21, %cst_11 [1] : vector<8x8x32xf32> to vector<8x32xf32>
    %23 = vector.broadcast %14 : vector<8x1xf32> to vector<8x32xf32>
    %24 = arith.divf %22, %23 : vector<8x32xf32>
    %25 = vector.broadcast %18 : vector<8x8x1xf32> to vector<8x8x32xf32>
    %26 = arith.addf %21, %25 : vector<8x8x32xf32>
    %cst_12 = arith.constant dense<0xFF800000> : vector<8x32xf32>
    %27 = vector.multi_reduction <maximumf>, %26, %cst_12 [1] : vector<8x8x32xf32> to vector<8x32xf32>
    %28 = arith.addf %24, %27 : vector<8x32xf32>
    %29 = arith.truncf %28 : vector<8x32xf32> to vector<8x32xbf16>
    %c0_13 = arith.constant 0 : index
    %c0_14 = arith.constant 0 : index
    %30 = vector.load %arg4[%c0_13, %c0_14] : memref<32x128xbf16, #tpu.memory_space<vmem>>, vector<32x128xbf16>
    %cst_15 = arith.constant dense<0.000000e+00> : vector<8x128xf32>
    %31 = tpu.matmul %29, %30, %cst_15 {dimension_numbers = #tpu.dot_dimension_numbers<[1], [0], [0], [1], [0, 0, 1, 1], [], []>} : vector<8x32xbf16>, vector<32x128xbf16>, vector<8x128xf32> -> vector<8x128xf32>
    %c0_16 = arith.constant 0 : index
    %c0_17 = arith.constant 0 : index
    %32 = vector.load %arg5[%c0_16, %c0_17] : memref<8x128xf32, #tpu.memory_space<vmem>>, vector<8x128xf32>
    tpu.vector_store %arg5[%c0_16, %c0_17], %31 {strides = array<i32>} : memref<8x128xf32, #tpu.memory_space<vmem>>, vector<8x128xf32>,
    return
  }
  func.func @transform_0(%arg0: i32) -> (i32, i32) {
    %c0_i32 = arith.constant 0 : i32
    %c0_i32_0 = arith.constant 0 : i32
    return %arg0, %c0_i32 : i32, i32
  }
  func.func @transform_1(%arg0: i32) -> (i32, i32, i32) {
    %c0_i32 = arith.constant 0 : i32
    %c0_i32_0 = arith.constant 0 : i32
    %c0_i32_1 = arith.constant 0 : i32
    return %arg0, %c0_i32, %c0_i32_0 : i32, i32, i32
  }
  func.func @transform_2(%arg0: i32) -> (i32, i32) {
    %c0_i32 = arith.constant 0 : i32
    %c0_i32_0 = arith.constant 0 : i32
    %c0_i32_1 = arith.constant 0 : i32
    return %c0_i32, %c0_i32_0 : i32, i32
  }
  func.func @transform_3(%arg0: i32) -> (i32, i32) {
    %c0_i32 = arith.constant 0 : i32
    %c0_i32_0 = arith.constant 0 : i32
    %c0_i32_1 = arith.constant 0 : i32
    return %c0_i32, %c0_i32_0 : i32, i32
  }
  func.func @transform_4(%arg0: i32) -> (i32, i32) {
    %c0_i32 = arith.constant 0 : i32
    %c0_i32_0 = arith.constant 0 : i32
    return %arg0, %c0_i32 : i32, i32
  }
}

module attributes {stable_mosaic.version = 11 : i64} {
  func.func @_readout_kernel(%arg0: i32, %arg1: memref<64x32xbf16, #tpu.memory_space<vmem>>, %arg2: memref<8x8x1xf32, #tpu.memory_space<vmem>>, %arg3: memref<32x128xbf16, #tpu.memory_space<vmem>>, %arg4: memref<32x128xbf16, #tpu.memory_space<vmem>>, %arg5: memref<8x128xf32, #tpu.memory_space<vmem>>) attributes {dimension_semantics = [#tpu.dimension_semantics<parallel>], iteration_bounds = array<i64: 2>, scalar_prefetch = 0 : i64, scratch_operands = 0 : i64, tpu.core_type = #tpu.core_type<tc>, window_params = [{transform_indices = @transform_0, window_bounds = array<i64: 64, 32>}, {transform_indices = @transform_1, window_bounds = array<i64: 8, 8, 1>}, {pipeline_mode = #tpu.pipeline_mode<synchronous>, transform_indices = @transform_2, window_bounds = array<i64: 32, 128>}, {pipeline_mode = #tpu.pipeline_mode<synchronous>, transform_indices = @transform_3, window_bounds = array<i64: 32, 128>}, {transform_indices = @transform_4, window_bounds = array<i64: 8, 128>}]} {
    %c0 = arith.constant 0 : index
    %c0_0 = arith.constant 0 : index
    %0 = vector.load %arg1[%c0, %c0_0] : memref<64x32xbf16, #tpu.memory_space<vmem>>, vector<64x32xbf16>
    %c0_1 = arith.constant 0 : index
    %c0_2 = arith.constant 0 : index
    %1 = vector.load %arg3[%c0_1, %c0_2] : memref<32x128xbf16, #tpu.memory_space<vmem>>, vector<32x128xbf16>
    %cst = arith.constant dense<0.000000e+00> : vector<64x128xf32>
    %2 = tpu.matmul %0, %1, %cst {dimension_numbers = #tpu.dot_dimension_numbers<[1], [0], [0], [1], [0, 0, 1, 1], [], []>} : vector<64x32xbf16>, vector<32x128xbf16>, vector<64x128xf32> -> vector<64x128xf32>
    %3 = vector.shape_cast %2 : vector<64x128xf32> to vector<8x8x128xf32>
    %4 = vector.extract_strided_slice %3 {offsets = [0, 0, 0], sizes = [8, 8, 32], strides = [1, 1, 1]} : vector<8x8x128xf32> to vector<8x8x32xf32>
    %cst_3 = arith.constant 0.000000e+00 : f32
    %5 = vector.broadcast %cst_3 : f32 to vector<8x8x32xf32>
    %6 = arith.maximumf %4, %5 : vector<8x8x32xf32>
    %7 = vector.extract_strided_slice %3 {offsets = [0, 0, 32], sizes = [8, 8, 1], strides = [1, 1, 1]} : vector<8x8x128xf32> to vector<8x8x1xf32>
    %8 = arith.negf %7 : vector<8x8x1xf32>
    %9 = math.exp %8 : vector<8x8x1xf32>
    %cst_4 = arith.constant 1.000000e+00 : f32
    %10 = vector.broadcast %cst_4 : f32 to vector<8x8x1xf32>
    %11 = arith.addf %10, %9 : vector<8x8x1xf32>
    %12 = arith.divf %10, %11 : vector<8x8x1xf32>
    %c0_5 = arith.constant 0 : index
    %c0_6 = arith.constant 0 : index
    %c0_7 = arith.constant 0 : index
    %13 = vector.load %arg2[%c0_5, %c0_6, %c0_7] : memref<8x8x1xf32, #tpu.memory_space<vmem>>, vector<8x8x1xf32>
    %cst_8 = arith.constant dense<0.000000e+00> : vector<8x1xf32>
    %14 = vector.multi_reduction <add>, %13, %cst_8 [1] : vector<8x8x1xf32> to vector<8x1xf32>
    %cst_9 = arith.constant 1.000000e+00 : f32
    %15 = vector.broadcast %cst_9 : f32 to vector<8x8x1xf32>
    %16 = arith.subf %13, %15 : vector<8x8x1xf32>
    %cst_10 = arith.constant 1.000000e+09 : f32
    %17 = vector.broadcast %cst_10 : f32 to vector<8x8x1xf32>
    %18 = arith.mulf %16, %17 : vector<8x8x1xf32>
    %19 = arith.mulf %13, %12 : vector<8x8x1xf32>
    %20 = vector.broadcast %19 : vector<8x8x1xf32> to vector<8x8x32xf32>
    %21 = arith.mulf %20, %6 : vector<8x8x32xf32>
    %cst_11 = arith.constant dense<0.000000e+00> : vector<8x32xf32>
    %22 = vector.multi_reduction <add>, %21, %cst_11 [1] : vector<8x8x32xf32> to vector<8x32xf32>
    %23 = vector.broadcast %14 : vector<8x1xf32> to vector<8x32xf32>
    %24 = arith.divf %22, %23 : vector<8x32xf32>
    %25 = vector.broadcast %18 : vector<8x8x1xf32> to vector<8x8x32xf32>
    %26 = arith.addf %21, %25 : vector<8x8x32xf32>
    %cst_12 = arith.constant dense<0xFF800000> : vector<8x32xf32>
    %27 = vector.multi_reduction <maximumf>, %26, %cst_12 [1] : vector<8x8x32xf32> to vector<8x32xf32>
    %28 = arith.addf %24, %27 : vector<8x32xf32>
    %29 = arith.truncf %28 : vector<8x32xf32> to vector<8x32xbf16>
    %c0_13 = arith.constant 0 : index
    %c0_14 = arith.constant 0 : index
    %30 = vector.load %arg4[%c0_13, %c0_14] : memref<32x128xbf16, #tpu.memory_space<vmem>>, vector<32x128xbf16>
    %cst_15 = arith.constant dense<0.000000e+00> : vector<8x128xf32>
    %31 = tpu.matmul %29, %30, %cst_15 {dimension_numbers = #tpu.dot_dimension_numbers<[1], [0], [0], [1], [0, 0, 1, 1], [], []>} : vector<8x32xbf16>, vector<32x128xbf16>, vector<8x128xf32> -> vector<8x128xf32>
    %c0_16 = arith.constant 0 : index
    %c0_17 = arith.constant 0 : index
    %32 = vector.load %arg5[%c0_16, %c0_17] : memref<8x128xf32, #tpu.memory_space<vmem>>, vector<8x128xf32>
    tpu.vector_store %arg5[%c0_16, %c0_17], %31 {strides = array<i32>} : memref<8x128xf32, #tpu.memory_space<vmem>>, vector<8x128xf32>,
    return
  }
  func.func @transform_0(%arg0: i32) -> (i32, i32) {
    %c0_i32 = arith.constant 0 : i32
    %c0_i32_0 = arith.constant 0 : i32
    return %arg0, %c0_i32 : i32, i32
  }
  func.func @transform_1(%arg0: i32) -> (i32, i32, i32) {
    %c0_i32 = arith.constant 0 : i32
    %c0_i32_0 = arith.constant 0 : i32
    %c0_i32_1 = arith.constant 0 : i32
    return %arg0, %c0_i32, %c0_i32_0 : i32, i32, i32
  }
  func.func @transform_2(%arg0: i32) -> (i32, i32) {
    %c0_i32 = arith.constant 0 : i32
    %c0_i32_0 = arith.constant 0 : i32
    %c0_i32_1 = arith.constant 0 : i32
    return %c0_i32, %c0_i32_0 : i32, i32
  }
  func.func @transform_3(%arg0: i32) -> (i32, i32) {
    %c0_i32 = arith.constant 0 : i32
    %c0_i32_0 = arith.constant 0 : i32
    %c0_i32_1 = arith.constant 0 : i32
    return %c0_i32, %c0_i32_0 : i32, i32
  }
  func.func @transform_4(%arg0: i32) -> (i32, i32) {
    %c0_i32 = arith.constant 0 : i32
    %c0_i32_0 = arith.constant 0 : i32
    return %arg0, %c0_i32 : i32, i32
  }
}

</mosaic_0001>

<llo_original>
// kernel: tpu_custom_call.1
$region0: #{tpu_custom_call.1}
  #allocation0 [shape = 'u32[]', space=smem, size = 0x4, offset = 0x4, fixed_abs, tag = 'smem constant byte address 0x4 - core index']
  #allocation1 [shape = 'u32[144,128]{1,0:T(1,128)}', space=vmem, size = 0x12000, scoped, tag = 'internal scratch']
  %s0 = inlined_call_operand.vmem [shape: bf16[128,32], index: 0, kind: input, shape index: {}]
  %s1 = inlined_call_operand.vmem [shape: f32[16,8,1], index: 1, kind: input, shape index: {}]
  %s2 = inlined_call_operand.vmem [shape: bf16[32,128], index: 2, kind: input, shape index: {}]
  %s3 = inlined_call_operand.vmem [shape: bf16[32,128], index: 3, kind: input, shape index: {}]
  %s4 = inlined_call_operand.hbm [shape: f32[16,128], index: 4, kind: output, shape index: {}]
  %s5 = sld [smem:[#allocation0]]
  $region49: #{tpu_custom_call.1} parent=0
    _
  %s7 = ssub.s32 1, %s5
  %s8 = scalar_select 0, %s7, %s5
  $region1: #{tpu_custom_call.1} parent=0
    #allocation2 [shape = 'u8[8192]{0}', space=vmem, size = 0x2000, scoped, tag = 'output window, operand 0']
    #allocation3 [shape = 's32[2]{0}', space=sflag, size = 0x8, scoped, tag = 'scoped memory for tpu_custom_call.1']
    %9 = vsyncpa [#allocation3], 0
    %s10 = scalar_lea.sflag [#allocation3], 1
    %11 = vsyncpa %s10, 0
    loop: start=0, step=1, limit=4
    $region2: #{tpu_custom_call.1} parent=1 // loop_pre_header
      _
    $region3: #{tpu_custom_call.1} parent=1 // loop_header
      %s13 = sphi 0, %s17
      %p14 = scmp.ge.s32.totalorder %s13, 4
      %s23 = sphi 0, %s25
      %s26 = sphi 0, %s23
      %s27 = sphi 0, %s26
      %s43 = sphi 0, %s27
      %s49 = sphi 0, %s51
      %s52 = sphi 0, %s49
      %s53 = sphi 0, %s52
      %s69 = sphi 0, %s53
      %s73 = sphi 0, %s73
      %s75 = sphi 0, %s73
      %s76 = sphi 0, %s75
      %s90 = sphi 0, %s76
      %s94 = sphi 0, %s94
      %s96 = sphi 0, %s94
      %s97 = sphi 0, %s96
      %s111 = sphi 0, %s97
      %s117 = sphi 0, %s119
      %s120 = sphi 0, %s117
      %s121 = sphi 0, %s120
      %s137 = sphi 0, %s121
    $region4: #{tpu_custom_call.1} parent=1 // loop_header_branch
      %16 = sbr.rel (%p14) target = $region8
    $region5: #{tpu_custom_call.1} parent=1 // loop_body
      %s18 = ssub.s32 %s13, 1
      %s19 = ssub.s32 %s13, 2
      %s20 = sadd.s32 %s13, 1
      %s21 = ssub.s32 %s13, %s20
      %p22 = scmp.eq.s32.totalorder %s21, 0
      %s24 = sadd.s32 %s23, 1
      %s25 = scalar_select %p22, %s23, %s24
      %p28 = pneg %p22
      %p29 = scmp.eq.s32.totalorder %s13, 1
      %p30 = por %p28, %p29
      %p31 = scmp.ne.s32.totalorder %s23, %s26
      %p32 = scmp.eq.s32.totalorder %s13, 0
      %p33 = por %p31, %p32
      %p34 = scmp.ne.s32.totalorder %s23, %s26
      %p35 = scmp.eq.s32.totalorder %s18, 1
      %p36 = por %p34, %p35
      %p37 = scmp.ne.s32.totalorder %s26, %s27
      %p38 = scmp.eq.s32.totalorder %s18, 0
      %p39 = por %p37, %p38
      %p40 = scmp.ne.s32.totalorder %s26, %s27
      %p41 = scmp.eq.s32.totalorder %s19, 1
      %p42 = por %p40, %p41
      %p44 = scmp.ne.s32.totalorder %s27, %s43
      %p45 = scmp.eq.s32.totalorder %s19, 0
      %p46 = por %p44, %p45
      %s47 = ssub.s32 %s13, %s20
      %p48 = scmp.eq.s32.totalorder %s47, 0
      %s50 = sadd.s32 %s49, 1
      %s51 = scalar_select %p48, %s49, %s50
      %p54 = pneg %p48
      %p55 = scmp.eq.s32.totalorder %s13, 1
      %p56 = por %p54, %p55
      %p57 = scmp.ne.s32.totalorder %s49, %s52
      %p58 = scmp.eq.s32.totalorder %s13, 0
      %p59 = por %p57, %p58
      %p60 = scmp.ne.s32.totalorder %s49, %s52
      %p61 = scmp.eq.s32.totalorder %s18, 1
      %p62 = por %p60, %p61
      %p63 = scmp.ne.s32.totalorder %s52, %s53
      %p64 = scmp.eq.s32.totalorder %s18, 0
      %p65 = por %p63, %p64
      %p66 = scmp.ne.s32.totalorder %s52, %s53
      %p67 = scmp.eq.s32.totalorder %s19, 1
      %p68 = por %p66, %p67
      %p70 = scmp.ne.s32.totalorder %s53, %s69
      %p71 = scmp.eq.s32.totalorder %s19, 0
      %p72 = por %p70, %p71
      %s74 = sadd.s32 %s73, 1
      %p77 = scmp.eq.s32.totalorder %s13, 1
      %p78 = scmp.ne.s32.totalorder %s73, %s75
      %p79 = scmp.eq.s32.totalorder %s13, 0
      %p80 = por %p78, %p79
      %p81 = scmp.ne.s32.totalorder %s73, %s75
      %p82 = scmp.eq.s32.totalorder %s18, 1
      %p83 = por %p81, %p82
      %p84 = scmp.ne.s32.totalorder %s75, %s76
      %p85 = scmp.eq.s32.totalorder %s18, 0
      %p86 = por %p84, %p85
      %p87 = scmp.ne.s32.totalorder %s75, %s76
      %p88 = scmp.eq.s32.totalorder %s19, 1
      %p89 = por %p87, %p88
      %p91 = scmp.ne.s32.totalorder %s76, %s90
      %p92 = scmp.eq.s32.totalorder %s19, 0
      %p93 = por %p91, %p92
      %s95 = sadd.s32 %s94, 1
      %p98 = scmp.eq.s32.totalorder %s13, 1
      %p99 = scmp.ne.s32.totalorder %s94, %s96
      %p100 = scmp.eq.s32.totalorder %s13, 0
      %p101 = por %p99, %p100
      %p102 = scmp.ne.s32.totalorder %s94, %s96
      %p103 = scmp.eq.s32.totalorder %s18, 1
      %p104 = por %p102, %p103
      %p105 = scmp.ne.s32.totalorder %s96, %s97
      %p106 = scmp.eq.s32.totalorder %s18, 0
      %p107 = por %p105, %p106
      %p108 = scmp.ne.s32.totalorder %s96, %s97
      %p109 = scmp.eq.s32.totalorder %s19, 1
      %p110 = por %p108, %p109
      %p112 = scmp.ne.s32.totalorder %s97, %s111
      %p113 = scmp.eq.s32.totalorder %s19, 0
      %p114 = por %p112, %p113
      %s115 = ssub.s32 %s13, %s20
      %p116 = scmp.eq.s32.totalorder %s115, 0
      %s118 = sadd.s32 %s117, 1
      %s119 = scalar_select %p116, %s117, %s118
      %p122 = pneg %p116
      %p123 = scmp.eq.s32.totalorder %s13, 1
      %p124 = por %p122, %p123
      %p125 = scmp.ne.s32.totalorder %s117, %s120
      %p126 = scmp.eq.s32.totalorder %s13, 0
      %p127 = por %p125, %p126
      %p128 = scmp.ne.s32.totalorder %s117, %s120
      %p129 = scmp.eq.s32.totalorder %s18, 1
      %p130 = por %p128, %p129
      %p131 = scmp.ne.s32.totalorder %s120, %s121
      %p132 = scmp.eq.s32.totalorder %s18, 0
      %p133 = por %p131, %p132
      %p134 = scmp.ne.s32.totalorder %s120, %s121
      %p135 = scmp.eq.s32.totalorder %s19, 1
      %p136 = por %p134, %p135
      %p138 = scmp.ne.s32.totalorder %s121, %s137
      %p139 = scmp.eq.s32.totalorder %s19, 0
      %p140 = por %p138, %p139
      %p141 = scmp.le.s32.totalorder 1, %s13
      %p142 = scmp.lt.s32.totalorder %s13, 3
      %p143 = pnand %p141, %p142
      %p144 = pneg %p143
      // Predicated region
      $region9: #{tpu_custom_call.1} parent=5 // pred_check
        _
      $region10: #{tpu_custom_call.1} parent=5 // pred_check_branch
        %146 = sbr.rel (%p143) target = $region12
      $region11: #{tpu_custom_call.1} parent=5 // pred_region
        %s147 = ssub.s32 %s13, 1
        // Predicated region
        $region13: #{tpu_custom_call.1} parent=11 // pred_check
          %p148 = pneg %p86
        $region14: #{tpu_custom_call.1} parent=11 // pred_check_branch
          %150 = sbr.rel (%p148) target = $region16
        $region15: #{tpu_custom_call.1} parent=11 // pred_region
          _
        $region16: #{tpu_custom_call.1} parent=11 // pred_fallthru
          _
        // Predicated region
        $region17: #{tpu_custom_call.1} parent=11 // pred_check
          %p151 = pneg %p107
        $region18: #{tpu_custom_call.1} parent=11 // pred_check_branch
          %153 = sbr.rel (%p151) target = $region20
        $region19: #{tpu_custom_call.1} parent=11 // pred_region
          _
        $region20: #{tpu_custom_call.1} parent=11 // pred_fallthru
          _
      $region12: #{tpu_custom_call.1} parent=5 // pred_fallthru
        _
      %p154 = scmp.lt.s32.totalorder %s13, 2
      // Predicated region
      $region21: #{tpu_custom_call.1} parent=5 // pred_check
        %p155 = pneg %p154
      $region22: #{tpu_custom_call.1} parent=5 // pred_check_branch
        %157 = sbr.rel (%p155) target = $region24
      $region23: #{tpu_custom_call.1} parent=5 // pred_region
        // Predicated region
        $region25: #{tpu_custom_call.1} parent=23 // pred_check
          %p158 = pneg %p33
        $region26: #{tpu_custom_call.1} parent=23 // pred_check_branch
          %160 = sbr.rel (%p158) target = $region28
        $region27: #{tpu_custom_call.1} parent=23 // pred_region
          %s161 = smul.u32 8, %s13
          %p162 = scmp.lt.s32.totalorder %s161, 15
          %s163 = scalar_select %p162, %s161, 15
          %s164 = smul.addr %s163, 4
          %s165 = scalar_lea.vmem %s0, %s164
          %s166 = smul.u32 8, %s13
        $region28: #{tpu_custom_call.1} parent=23 // pred_fallthru
          _
        // Predicated region
        $region29: #{tpu_custom_call.1} parent=23 // pred_check
          %p167 = pneg %p59
        $region30: #{tpu_custom_call.1} parent=23 // pred_check_branch
          %169 = sbr.rel (%p167) target = $region32
        $region31: #{tpu_custom_call.1} parent=23 // pred_region
          %s170 = smul.u32 8, %s13
          %p171 = scmp.lt.s32.totalorder %s170, 15
          %s172 = scalar_select %p171, %s170, 15
          %s173 = smul.addr %s172, 8
          %s174 = scalar_lea.vmem %s1, %s173
          %s175 = smul.u32 8, %s13
        $region32: #{tpu_custom_call.1} parent=23 // pred_fallthru
          _
      $region24: #{tpu_custom_call.1} parent=5 // pred_fallthru
        _
      %p176 = scmp.le.s32.totalorder 1, %s13
      %p177 = scmp.lt.s32.totalorder %s13, 3
      %p178 = pnand %p176, %p177
      %p179 = pneg %p178
      // Predicated region
      $region33: #{tpu_custom_call.1} parent=5 // pred_check
        _
      $region34: #{tpu_custom_call.1} parent=5 // pred_check_branch
        %181 = sbr.rel (%p178) target = $region36
      $region35: #{tpu_custom_call.1} parent=5 // pred_region
        %s182 = ssub.s32 %s13, 1
        %s183 = smul.u32 8, %s18
        %p184 = scmp.lt.s32.totalorder %s183, 15
        %s185 = scalar_select %p184, %s183, 15
        %s186 = smul.addr %s185, 4
        %s187 = scalar_lea.vmem %s0, %s186
        %p188 = pneg %p39
        %p189 = pneg %p36
        %s190 = smul.u32 8, %s18
        %p191 = scmp.lt.s32.totalorder %s190, 15
        %s192 = scalar_select %p191, %s190, 15
        %s193 = smul.addr %s192, 8
        %s194 = scalar_lea.vmem %s1, %s193
        %p195 = pneg %p65
        %p196 = pneg %p62
        %p197 = pneg %p86
        %p198 = pneg %p83
        %p199 = pneg %p107
        %p200 = pneg %p104
        %p201 = pneg %p133
        %p202 = pneg %p130
        %s203 = sand.u32 %s120, 1
        %s204 = scalar_lea.sflag [#allocation3], %s203
        %s205 = sand.u32 %s120, 1
        %s206 = smul.addr %s205, 8
        %s207 = scalar_lea.vmem [#allocation2], %s206
        %s208 = smul.u32 8, %s18
        %p209 = scmp.lt.s32.totalorder %s208, 15
        %s210 = scalar_select %p209, %s208, 15
        %s211 = smul.addr %s210, 4
        %s212 = scalar_lea.vmem %s0, %s211
        %s213 = smul.u32 8, %s18
        %s214 = smul.u32 8, %s18
        %p215 = scmp.lt.s32.totalorder %s214, 15
        %s216 = scalar_select %p215, %s214, 15
        %s217 = smul.addr %s216, 8
        %s218 = scalar_lea.vmem %s1, %s217
        %s219 = smul.u32 8, %s18
        %v221 = vld [vmem:[%s212] sm:$0xf]
        %v222 = vld [vmem:[%s212 + $0x4] sm:$0xf]
        %v223 = vld [vmem:[%s212 + $0x8] sm:$0xf]
        %v224 = vld [vmem:[%s212 + $0xc] sm:$0xf]
        %v225 = vld [vmem:[%s212 + $0x10] sm:$0xf]
        %v226 = vld [vmem:[%s212 + $0x14] sm:$0xf]
        %v227 = vld [vmem:[%s212 + $0x18] sm:$0xf]
        %v228 = vld [vmem:[%s212 + $0x1c] sm:$0xf]
        %v229 = vld [vmem:[%s2] sm:$0xf]
        %v230 = vld [vmem:[%s2 + $0x4] sm:$0xf]
        %v231 = vld [vmem:[%s2 + $0x8] sm:$0xf]
        %v232 = vld [vmem:[%s2 + $0xc] sm:$0xf]
        %v241 = vunpack.c.l.b16 %v221
        %v242 = vunpack.c.l.b16 %v222
        %v243 = vunpack.c.l.b16 %v223
        %v244 = vunpack.c.l.b16 %v224
        %v245 = vunpack.c.l.b16 %v225
        %v246 = vunpack.c.l.b16 %v226
        %v247 = vunpack.c.l.b16 %v227
        %v248 = vunpack.c.l.b16 %v228
        %v249 = vpack.c.b16 %v242, %v241
        %v250 = vpack.c.b16 %v244, %v243
        %v251 = vpack.c.b16 %v246, %v245
        %v252 = vpack.c.b16 %v248, %v247
        %v257 = vunpack.c.l.b16 %v229
        %v258 = vunpack.c.l.b16 %v230
        %v259 = vunpack.c.l.b16 %v231
        %v260 = vunpack.c.l.b16 %v232
        %v261 = vpack.c.b16 %v258, %v257
        %v262 = vpack.c.b16 %v260, %v259
        %vm265 = vcmask 261120
        %v267 = vsel %vm265, %v249, 0
        %v270 = vsel %vm265, %v250, 0
        %v273 = vsel %vm265, %v251, 0
        %v276 = vsel %vm265, %v252, 0
        %278 = vmatprep.subr.bf16.mxu0 0
        %279 = vmatpush1.bf16.msra.mxu0 %v261
        %280 = vmatprep.subr.bf16.mxu0 0
        %281 = vmatpush1.bf16.msra.mxu0 %v262
        %282 = vmatprep.subr.bf16.mxu0 0
        %283 = vmatpush1.bf16.msra.mxu0 0
        %284 = vmatprep.subr.bf16.mxu0 0
        %285 = vmatpush1.bf16.msra.mxu0 0
        %286 = vmatprep.subr.bf16.mxu0 0
        %287 = vmatpush1.bf16.msra.mxu0 0
        %288 = vmatprep.subr.bf16.mxu0 0
        %289 = vmatpush1.bf16.msra.mxu0 0
        %290 = vmatprep.subr.bf16.mxu0 0
        %291 = vmatpush1.bf16.msra.mxu0 0
        %292 = vmatprep.subr.bf16.mxu0 0
        %293 = vmatpush1.bf16.msra.mxu0 0
        %294 = vmatprep.subr.bf16.mxu0 0
        %295 = vmatpush1.bf16.msra.mxu0 0
        %296 = vmatprep.subr.bf16.mxu0 0
        %297 = vmatpush1.bf16.msra.mxu0 0
        %298 = vmatprep.subr.bf16.mxu0 0
        %299 = vmatpush1.bf16.msra.mxu0 0
        %300 = vmatprep.subr.bf16.mxu0 0
        %301 = vmatpush1.bf16.msra.mxu0 0
        %302 = vmatprep.subr.bf16.mxu0 0
        %303 = vmatpush1.bf16.msra.mxu0 0
        %304 = vmatprep.subr.bf16.mxu0 0
        %305 = vmatpush1.bf16.msra.mxu0 0
        %306 = vmatprep.subr.bf16.mxu0 0
        %307 = vmatpush1.bf16.msra.mxu0 0
        %308 = vmatprep.subr.bf16.mxu0 0
        %309 = vmatpush1.bf16.msra.mxu0 0
        %310 = vmatprep.mubr.bf16.mxu0 0
        %311 = vmatmul.mubr.bf16.gmra.mrb[0].mxu0 %v267
        %v312 = vpop.f32.mrb[0].mxu0
        %v313 = vadd.f32 0.0, %v312
        %v314 = vpop.f32.mrb[0].mxu0
        %v315 = vpop.f32.mrb[0].mxu0
        %v316 = vadd.f32 0.0, %v315
        %v317 = vpop.f32.mrb[0].mxu0
        %318 = vmatprep.mubr.bf16.mxu0 0
        %319 = vmatmul.mubr.bf16.gmra.mrb[0].mxu0 %v270
        %v320 = vpop.f32.mrb[0].mxu0
        %v321 = vadd.f32 0.0, %v320
        %v322 = vpop.f32.mrb[0].mxu0
        %v323 = vpop.f32.mrb[0].mxu0
        %v324 = vadd.f32 0.0, %v323
        %v325 = vpop.f32.mrb[0].mxu0
        %326 = vmatprep.mubr.bf16.mxu0 0
        %327 = vmatmul.mubr.bf16.gmra.mrb[0].mxu0 %v273
        %v328 = vpop.f32.mrb[0].mxu0
        %v329 = vadd.f32 0.0, %v328
        %v330 = vpop.f32.mrb[0].mxu0
        %v331 = vpop.f32.mrb[0].mxu0
        %v332 = vadd.f32 0.0, %v331
        %v333 = vpop.f32.mrb[0].mxu0
        %334 = vmatprep.mubr.bf16.mxu0 0
        %335 = vmatmul.mubr.bf16.gmra.mrb[0].mxu0 %v276
        %v336 = vpop.f32.mrb[0].mxu0
        %v337 = vadd.f32 0.0, %v336
        %v338 = vpop.f32.mrb[0].mxu0
        %v339 = vpop.f32.mrb[0].mxu0
        %v340 = vadd.f32 0.0, %v339
        %v341 = vpop.f32.mrb[0].mxu0
        %342 = vdwg.mxu0
        %v343 = vmax.f32 %v313, 0.0
        %v344 = vmax.f32 %v316, 0.0
        %v345 = vmax.f32 %v321, 0.0
        %v346 = vmax.f32 %v324, 0.0
        %v347 = vmax.f32 %v329, 0.0
        %v348 = vmax.f32 %v332, 0.0
        %v349 = vmax.f32 %v337, 0.0
        %v350 = vmax.f32 %v340, 0.0
        %v351 = vxor.u32 %v313, 2147483648
        %v352 = vxor.u32 %v316, 2147483648
        %v353 = vxor.u32 %v321, 2147483648
        %v354 = vxor.u32 %v324, 2147483648
        %v355 = vxor.u32 %v329, 2147483648
        %v356 = vxor.u32 %v332, 2147483648
        %v357 = vxor.u32 %v337, 2147483648
        %v358 = vxor.u32 %v340, 2147483648
        %v359 = vmul.f32 %v351, 1.442695
        %v360 = vpow.pop %v359
        %v361 = vmul.f32 %v352, 1.442695
        %v362 = vpow.pop %v361
        %v363 = vmul.f32 %v353, 1.442695
        %v364 = vpow.pop %v363
        %v365 = vmul.f32 %v354, 1.442695
        %v366 = vpow.pop %v365
        %v367 = vmul.f32 %v355, 1.442695
        %v368 = vpow.pop %v367
        %v369 = vmul.f32 %v356, 1.442695
        %v370 = vpow.pop %v369
        %v371 = vmul.f32 %v357, 1.442695
        %v372 = vpow.pop %v371
        %v373 = vmul.f32 %v358, 1.442695
        %v374 = vpow.pop %v373
        %v375 = vadd.f32 %v360, 1.0
        %v376 = vadd.f32 %v362, 1.0
        %v377 = vadd.f32 %v364, 1.0
        %v378 = vadd.f32 %v366, 1.0
        %v379 = vadd.f32 %v368, 1.0
        %v380 = vadd.f32 %v370, 1.0
        %v381 = vadd.f32 %v372, 1.0
        %v382 = vadd.f32 %v374, 1.0
        %v383 = vrcp.pop %v375
        %v384 = vmul.f32 1.0, %v383
        %v385 = vrcp.pop %v376
        %v386 = vmul.f32 1.0, %v385
        %v387 = vrcp.pop %v377
        %v388 = vmul.f32 1.0, %v387
        %v389 = vrcp.pop %v378
        %v390 = vmul.f32 1.0, %v389
        %v391 = vrcp.pop %v379
        %v392 = vmul.f32 1.0, %v391
        %v393 = vrcp.pop %v380
        %v394 = vmul.f32 1.0, %v393
        %v395 = vrcp.pop %v381
        %v396 = vmul.f32 1.0, %v395
        %v397 = vrcp.pop %v382
        %v398 = vmul.f32 1.0, %v397
        %v399 = vld [vmem:[%s218] sm:$0xff]
        %v400 = vld [vmem:[%s218 + $0x8] sm:$0xff]
        %v401 = vld [vmem:[%s218 + $0x10] sm:$0xff]
        %v402 = vld [vmem:[%s218 + $0x18] sm:$0xff]
        %v403 = vld [vmem:[%s218 + $0x20] sm:$0xff]
        %v404 = vld [vmem:[%s218 + $0x28] sm:$0xff]
        %v405 = vld [vmem:[%s218 + $0x30] sm:$0xff]
        %v406 = vld [vmem:[%s218 + $0x38] sm:$0xff]
        %vm407 = vcmask 7168
        %v408 = vsel %vm407, %v399, 0.0
        %v409 = vrot.slane %v408, 4
        %v410 = vadd.f32 %v408, %v409
        %v411 = vrot.slane %v410, 2
        %v412 = vadd.f32 %v410, %v411
        %v413 = vrot.slane %v412, 1
        %v414 = vadd.f32 %v412, %v413
        %v415 = vsel %vm407, %v400, 0.0
        %v416 = vrot.slane %v415, 4
        %v417 = vadd.f32 %v415, %v416
        %v418 = vrot.slane %v417, 2
        %v419 = vadd.f32 %v417, %v418
        %v420 = vrot.slane %v419, 1
        %v421 = vadd.f32 %v419, %v420
        %v422 = vsel %vm407, %v401, 0.0
        %v423 = vrot.slane %v422, 4
        %v424 = vadd.f32 %v422, %v423
        %v425 = vrot.slane %v424, 2
        %v426 = vadd.f32 %v424, %v425
        %v427 = vrot.slane %v426, 1
        %v428 = vadd.f32 %v426, %v427
        %v429 = vsel %vm407, %v402, 0.0
        %v430 = vrot.slane %v429, 4
        %v431 = vadd.f32 %v429, %v430
        %v432 = vrot.slane %v431, 2
        %v433 = vadd.f32 %v431, %v432
        %v434 = vrot.slane %v433, 1
        %v435 = vadd.f32 %v433, %v434
        %v436 = vsel %vm407, %v403, 0.0
        %v437 = vrot.slane %v436, 4
        %v438 = vadd.f32 %v436, %v437
        %v439 = vrot.slane %v438, 2
        %v440 = vadd.f32 %v438, %v439
        %v441 = vrot.slane %v440, 1
        %v442 = vadd.f32 %v440, %v441
        %v443 = vsel %vm407, %v404, 0.0
        %v444 = vrot.slane %v443, 4
        %v445 = vadd.f32 %v443, %v444
        %v446 = vrot.slane %v445, 2
        %v447 = vadd.f32 %v445, %v446
        %v448 = vrot.slane %v447, 1
        %v449 = vadd.f32 %v447, %v448
        %v450 = vsel %vm407, %v405, 0.0
        %v451 = vrot.slane %v450, 4
        %v452 = vadd.f32 %v450, %v451
        %v453 = vrot.slane %v452, 2
        %v454 = vadd.f32 %v452, %v453
        %v455 = vrot.slane %v454, 1
        %v456 = vadd.f32 %v454, %v455
        %v457 = vsel %vm407, %v406, 0.0
        %v458 = vrot.slane %v457, 4
        %v459 = vadd.f32 %v457, %v458
        %v460 = vrot.slane %v459, 2
        %v461 = vadd.f32 %v459, %v460
        %v462 = vrot.slane %v461, 1
        %v463 = vadd.f32 %v461, %v462
        %v464 = vsub.f32 %v399, 1.0
        %v465 = vsub.f32 %v400, 1.0
        %v466 = vsub.f32 %v401, 1.0
        %v467 = vsub.f32 %v402, 1.0
        %v468 = vsub.f32 %v403, 1.0
        %v469 = vsub.f32 %v404, 1.0
        %v470 = vsub.f32 %v405, 1.0
        %v471 = vsub.f32 %v406, 1.0
        %v472 = vmul.f32 %v464, 1e+09
        %v473 = vmul.f32 %v465, 1e+09
        %v474 = vmul.f32 %v466, 1e+09
        %v475 = vmul.f32 %v467, 1e+09
        %v476 = vmul.f32 %v468, 1e+09
        %v477 = vmul.f32 %v469, 1e+09
        %v478 = vmul.f32 %v470, 1e+09
        %v479 = vmul.f32 %v471, 1e+09
        %488 = vrot.lane.b32.xlu0 %v384, 96
        %v489 = vpop.permute.xlu0 %488
        %490 = vrot.lane.b32.xlu0 %v386, 96
        %v491 = vpop.permute.xlu0 %490
        %492 = vrot.lane.b32.xlu0 %v388, 96
        %v493 = vpop.permute.xlu0 %492
        %494 = vrot.lane.b32.xlu0 %v390, 96
        %v495 = vpop.permute.xlu0 %494
        %496 = vrot.lane.b32.xlu0 %v392, 96
        %v497 = vpop.permute.xlu0 %496
        %498 = vrot.lane.b32.xlu0 %v394, 96
        %v499 = vpop.permute.xlu0 %498
        %500 = vrot.lane.b32.xlu0 %v396, 96
        %v501 = vpop.permute.xlu0 %500
        %502 = vrot.lane.b32.xlu0 %v398, 96
        %v503 = vpop.permute.xlu0 %502
        %v512 = vmul.f32 %v399, %v489
        %v513 = vmul.f32 %v400, %v491
        %v514 = vmul.f32 %v401, %v493
        %v515 = vmul.f32 %v402, %v495
        %v516 = vmul.f32 %v403, %v497
        %v517 = vmul.f32 %v404, %v499
        %v518 = vmul.f32 %v405, %v501
        %v519 = vmul.f32 %v406, %v503
        %521 = vset.pattern.permute.xlu0 0
        %522 = vperm.xlu0 %521, %v512
        %v523 = vpop.permute.xlu0 %522
        %526 = vset.pattern.permute.xlu0 0
        %527 = vperm.xlu0 %526, %v513
        %v528 = vpop.permute.xlu0 %527
        %531 = vset.pattern.permute.xlu0 0
        %532 = vperm.xlu0 %531, %v514
        %v533 = vpop.permute.xlu0 %532
        %536 = vset.pattern.permute.xlu0 0
        %537 = vperm.xlu0 %536, %v515
        %v538 = vpop.permute.xlu0 %537
        %541 = vset.pattern.permute.xlu0 0
        %542 = vperm.xlu0 %541, %v516
        %v543 = vpop.permute.xlu0 %542
        %546 = vset.pattern.permute.xlu0 0
        %547 = vperm.xlu0 %546, %v517
        %v548 = vpop.permute.xlu0 %547
        %551 = vset.pattern.permute.xlu0 0
        %552 = vperm.xlu0 %551, %v518
        %v553 = vpop.permute.xlu0 %552
        %556 = vset.pattern.permute.xlu0 0
        %557 = vperm.xlu0 %556, %v519
        %v558 = vpop.permute.xlu0 %557
        %v560 = vmul.f32 %v523, %v343
        %v561 = vmul.f32 %v528, %v344
        %v562 = vmul.f32 %v533, %v345
        %v563 = vmul.f32 %v538, %v346
        %v564 = vmul.f32 %v543, %v347
        %v565 = vmul.f32 %v548, %v348
        %v566 = vmul.f32 %v553, %v349
        %v567 = vmul.f32 %v558, %v350
        %v568 = vsel %vm265, %v560, 0.0
        %v569 = vrot.slane %v568, 4
        %v570 = vadd.f32 %v568, %v569
        %v571 = vrot.slane %v570, 2
        %v572 = vadd.f32 %v570, %v571
        %v573 = vrot.slane %v572, 1
        %v574 = vadd.f32 %v572, %v573
        %v575 = vsel %vm265, %v561, 0.0
        %v576 = vrot.slane %v575, 4
        %v577 = vadd.f32 %v575, %v576
        %v578 = vrot.slane %v577, 2
        %v579 = vadd.f32 %v577, %v578
        %v580 = vrot.slane %v579, 1
        %v581 = vadd.f32 %v579, %v580
        %v582 = vsel %vm265, %v562, 0.0
        %v583 = vrot.slane %v582, 4
        %v584 = vadd.f32 %v582, %v583
        %v585 = vrot.slane %v584, 2
        %v586 = vadd.f32 %v584, %v585
        %v587 = vrot.slane %v586, 1
        %v588 = vadd.f32 %v586, %v587
        %v589 = vsel %vm265, %v563, 0.0
        %v590 = vrot.slane %v589, 4
        %v591 = vadd.f32 %v589, %v590
        %v592 = vrot.slane %v591, 2
        %v593 = vadd.f32 %v591, %v592
        %v594 = vrot.slane %v593, 1
        %v595 = vadd.f32 %v593, %v594
        %v596 = vsel %vm265, %v564, 0.0
        %v597 = vrot.slane %v596, 4
        %v598 = vadd.f32 %v596, %v597
        %v599 = vrot.slane %v598, 2
        %v600 = vadd.f32 %v598, %v599
        %v601 = vrot.slane %v600, 1
        %v602 = vadd.f32 %v600, %v601
        %v603 = vsel %vm265, %v565, 0.0
        %v604 = vrot.slane %v603, 4
        %v605 = vadd.f32 %v603, %v604
        %v606 = vrot.slane %v605, 2
        %v607 = vadd.f32 %v605, %v606
        %v608 = vrot.slane %v607, 1
        %v609 = vadd.f32 %v607, %v608
        %v610 = vsel %vm265, %v566, 0.0
        %v611 = vrot.slane %v610, 4
        %v612 = vadd.f32 %v610, %v611
        %v613 = vrot.slane %v612, 2
        %v614 = vadd.f32 %v612, %v613
        %v615 = vrot.slane %v614, 1
        %v616 = vadd.f32 %v614, %v615
        %v617 = vsel %vm265, %v567, 0.0
        %v618 = vrot.slane %v617, 4
        %v619 = vadd.f32 %v617, %v618
        %v620 = vrot.slane %v619, 2
        %v621 = vadd.f32 %v619, %v620
        %v622 = vrot.slane %v621, 1
        %v623 = vadd.f32 %v621, %v622
        %625 = vset.pattern.permute.xlu0 0
        %626 = vperm.xlu0 %625, %v414
        %v627 = vpop.permute.xlu0 %626
        %630 = vset.pattern.permute.xlu0 0
        %631 = vperm.xlu0 %630, %v421
        %v632 = vpop.permute.xlu0 %631
        %635 = vset.pattern.permute.xlu0 0
        %636 = vperm.xlu0 %635, %v428
        %v637 = vpop.permute.xlu0 %636
        %640 = vset.pattern.permute.xlu0 0
        %641 = vperm.xlu0 %640, %v435
        %v642 = vpop.permute.xlu0 %641
        %645 = vset.pattern.permute.xlu0 0
        %646 = vperm.xlu0 %645, %v442
        %v647 = vpop.permute.xlu0 %646
        %650 = vset.pattern.permute.xlu0 0
        %651 = vperm.xlu0 %650, %v449
        %v652 = vpop.permute.xlu0 %651
        %655 = vset.pattern.permute.xlu0 0
        %656 = vperm.xlu0 %655, %v456
        %v657 = vpop.permute.xlu0 %656
        %660 = vset.pattern.permute.xlu0 0
        %661 = vperm.xlu0 %660, %v463
        %v662 = vpop.permute.xlu0 %661
        %v664 = vrcp.pop %v627
        %v665 = vmul.f32 %v574, %v664
        %v666 = vrcp.pop %v632
        %v667 = vmul.f32 %v581, %v666
        %v668 = vrcp.pop %v637
        %v669 = vmul.f32 %v588, %v668
        %v670 = vrcp.pop %v642
        %v671 = vmul.f32 %v595, %v670
        %v672 = vrcp.pop %v647
        %v673 = vmul.f32 %v602, %v672
        %v674 = vrcp.pop %v652
        %v675 = vmul.f32 %v609, %v674
        %v676 = vrcp.pop %v657
        %v677 = vmul.f32 %v616, %v676
        %v678 = vrcp.pop %v662
        %v679 = vmul.f32 %v623, %v678
        %681 = vset.pattern.permute.xlu0 0
        %682 = vperm.xlu0 %681, %v472
        %v683 = vpop.permute.xlu0 %682
        %686 = vset.pattern.permute.xlu0 0
        %687 = vperm.xlu0 %686, %v473
        %v688 = vpop.permute.xlu0 %687
        %691 = vset.pattern.permute.xlu0 0
        %692 = vperm.xlu0 %691, %v474
        %v693 = vpop.permute.xlu0 %692
        %696 = vset.pattern.permute.xlu0 0
        %697 = vperm.xlu0 %696, %v475
        %v698 = vpop.permute.xlu0 %697
        %701 = vset.pattern.permute.xlu0 0
        %702 = vperm.xlu0 %701, %v476
        %v703 = vpop.permute.xlu0 %702
        %706 = vset.pattern.permute.xlu0 0
        %707 = vperm.xlu0 %706, %v477
        %v708 = vpop.permute.xlu0 %707
        %711 = vset.pattern.permute.xlu0 0
        %712 = vperm.xlu0 %711, %v478
        %v713 = vpop.permute.xlu0 %712
        %716 = vset.pattern.permute.xlu0 0
        %717 = vperm.xlu0 %716, %v479
        %v718 = vpop.permute.xlu0 %717
        %v720 = vadd.f32 %v560, %v683
        %v721 = vadd.f32 %v561, %v688
        %v722 = vadd.f32 %v562, %v693
        %v723 = vadd.f32 %v563, %v698
        %v724 = vadd.f32 %v564, %v703
        %v725 = vadd.f32 %v565, %v708
        %v726 = vadd.f32 %v566, %v713
        %v727 = vadd.f32 %v567, %v718
        %v728 = vsel %vm265, %v720, -inf
        %v729 = vrot.slane %v728, 4
        %v730 = vmax.f32 %v728, %v729
        %v731 = vrot.slane %v730, 2
        %v732 = vmax.f32 %v730, %v731
        %v733 = vrot.slane %v732, 1
        %v734 = vmax.f32 %v732, %v733
        %v735 = vsel %vm265, %v721, -inf
        %v736 = vrot.slane %v735, 4
        %v737 = vmax.f32 %v735, %v736
        %v738 = vrot.slane %v737, 2
        %v739 = vmax.f32 %v737, %v738
        %v740 = vrot.slane %v739, 1
        %v741 = vmax.f32 %v739, %v740
        %v742 = vsel %vm265, %v722, -inf
        %v743 = vrot.slane %v742, 4
        %v744 = vmax.f32 %v742, %v743
        %v745 = vrot.slane %v744, 2
        %v746 = vmax.f32 %v744, %v745
        %v747 = vrot.slane %v746, 1
        %v748 = vmax.f32 %v746, %v747
        %v749 = vsel %vm265, %v723, -inf
        %v750 = vrot.slane %v749, 4
        %v751 = vmax.f32 %v749, %v750
        %v752 = vrot.slane %v751, 2
        %v753 = vmax.f32 %v751, %v752
        %v754 = vrot.slane %v753, 1
        %v755 = vmax.f32 %v753, %v754
        %v756 = vsel %vm265, %v724, -inf
        %v757 = vrot.slane %v756, 4
        %v758 = vmax.f32 %v756, %v757
        %v759 = vrot.slane %v758, 2
        %v760 = vmax.f32 %v758, %v759
        %v761 = vrot.slane %v760, 1
        %v762 = vmax.f32 %v760, %v761
        %v763 = vsel %vm265, %v725, -inf
        %v764 = vrot.slane %v763, 4
        %v765 = vmax.f32 %v763, %v764
        %v766 = vrot.slane %v765, 2
        %v767 = vmax.f32 %v765, %v766
        %v768 = vrot.slane %v767, 1
        %v769 = vmax.f32 %v767, %v768
        %v770 = vsel %vm265, %v726, -inf
        %v771 = vrot.slane %v770, 4
        %v772 = vmax.f32 %v770, %v771
        %v773 = vrot.slane %v772, 2
        %v774 = vmax.f32 %v772, %v773
        %v775 = vrot.slane %v774, 1
        %v776 = vmax.f32 %v774, %v775
        %v777 = vsel %vm265, %v727, -inf
        %v778 = vrot.slane %v777, 4
        %v779 = vmax.f32 %v777, %v778
        %v780 = vrot.slane %v779, 2
        %v781 = vmax.f32 %v779, %v780
        %v782 = vrot.slane %v781, 1
        %v783 = vmax.f32 %v781, %v782
        %v784 = vadd.f32 %v665, %v734
        %v785 = vadd.f32 %v667, %v741
        %v786 = vadd.f32 %v669, %v748
        %v787 = vadd.f32 %v671, %v755
        %v788 = vadd.f32 %v673, %v762
        %v789 = vadd.f32 %v675, %v769
        %v790 = vadd.f32 %v677, %v776
        %v791 = vadd.f32 %v679, %v783
        %v792 = vpack.c.bf16 %v784, %v784
        %v793 = vpack.c.bf16 %v785, %v785
        %v794 = vpack.c.bf16 %v786, %v786
        %v795 = vpack.c.bf16 %v787, %v787
        %v796 = vpack.c.bf16 %v788, %v788
        %v797 = vpack.c.bf16 %v789, %v789
        %v798 = vpack.c.bf16 %v790, %v790
        %v799 = vpack.c.bf16 %v791, %v791
        %v800 = vld [vmem:[%s3] sm:$0xf]
        %v801 = vld [vmem:[%s3 + $0x4] sm:$0xf]
        %v802 = vld [vmem:[%s3 + $0x8] sm:$0xf]
        %v803 = vld [vmem:[%s3 + $0xc] sm:$0xf]
        %v812 = vunpack.c.l.b16 %v792
        %v813 = vunpack.c.l.b16 %v793
        %v814 = vunpack.c.l.b16 %v794
        %v815 = vunpack.c.l.b16 %v795
        %v816 = vunpack.c.l.b16 %v796
        %v817 = vunpack.c.l.b16 %v797
        %v818 = vunpack.c.l.b16 %v798
        %v819 = vunpack.c.l.b16 %v799
        %vm820 = vcmask 1041409
        %v821 = vsel %vm820, %v813, %v812
        %vm822 = vcmask 1042434
        %v823 = vsel %vm822, %v814, %v821
        %vm824 = vcmask 1043459
        %v825 = vsel %vm824, %v815, %v823
        %vm826 = vcmask 1044484
        %v827 = vsel %vm826, %v816, %v825
        %vm828 = vcmask 1045509
        %v829 = vsel %vm828, %v817, %v827
        %vm830 = vcmask 1046534
        %v831 = vsel %vm830, %v818, %v829
        %vm832 = vcmask 1047559
        %v833 = vsel %vm832, %v819, %v831
        %v834 = vpack.c.b16 %v833, %v833
        %v839 = vunpack.c.l.b16 %v800
        %v840 = vunpack.c.l.b16 %v801
        %v841 = vunpack.c.l.b16 %v802
        %v842 = vunpack.c.l.b16 %v803
        %v843 = vpack.c.b16 %v840, %v839
        %v844 = vpack.c.b16 %v842, %v841
        %v848 = vsel %vm265, %v834, 0
        %850 = vmatprep.subr.bf16.mxu0 0
        %851 = vmatpush1.bf16.msra.mxu0 %v843
        %852 = vmatprep.subr.bf16.mxu0 0
        %853 = vmatpush1.bf16.msra.mxu0 %v844
        %854 = vmatprep.subr.bf16.mxu0 0
        %855 = vmatpush1.bf16.msra.mxu0 0
        %856 = vmatprep.subr.bf16.mxu0 0
        %857 = vmatpush1.bf16.msra.mxu0 0
        %858 = vmatprep.subr.bf16.mxu0 0
        %859 = vmatpush1.bf16.msra.mxu0 0
        %860 = vmatprep.subr.bf16.mxu0 0
        %861 = vmatpush1.bf16.msra.mxu0 0
        %862 = vmatprep.subr.bf16.mxu0 0
        %863 = vmatpush1.bf16.msra.mxu0 0
        %864 = vmatprep.subr.bf16.mxu0 0
        %865 = vmatpush1.bf16.msra.mxu0 0
        %866 = vmatprep.subr.bf16.mxu0 0
        %867 = vmatpush1.bf16.msra.mxu0 0
        %868 = vmatprep.subr.bf16.mxu0 0
        %869 = vmatpush1.bf16.msra.mxu0 0
        %870 = vmatprep.subr.bf16.mxu0 0
        %871 = vmatpush1.bf16.msra.mxu0 0
        %872 = vmatprep.subr.bf16.mxu0 0
        %873 = vmatpush1.bf16.msra.mxu0 0
        %874 = vmatprep.subr.bf16.mxu0 0
        %875 = vmatpush1.bf16.msra.mxu0 0
        %876 = vmatprep.subr.bf16.mxu0 0
        %877 = vmatpush1.bf16.msra.mxu0 0
        %878 = vmatprep.subr.bf16.mxu0 0
        %879 = vmatpush1.bf16.msra.mxu0 0
        %880 = vmatprep.subr.bf16.mxu0 0
        %881 = vmatpush1.bf16.msra.mxu0 0
        %882 = vmatprep.mubr.bf16.mxu0 0
        %883 = vmatmul.mubr.bf16.gmra.mrb[0].mxu0 %v848
        %v884 = vpop.f32.mrb[0].mxu0
        %v885 = vadd.f32 0.0, %v884
        %v886 = vpop.f32.mrb[0].mxu0
        %v887 = vpop.f32.mrb[0].mxu0
        %v888 = vpop.f32.mrb[0].mxu0
        %889 = vdwg.mxu0
        %890 = vst [vmem:[%s207] sm:$0xff] %v885
        %s891 = sand.u32 %s120, 1
        %s892 = scalar_lea.sflag [#allocation3], %s891
        %s893 = sand.u32 %s120, 1
        %s894 = smul.addr %s893, 8
        %s895 = scalar_lea.vmem [#allocation2], %s894
        // Predicated region
        $region37: #{tpu_custom_call.1} parent=35 // pred_check
          %p896 = pneg %p130
        $region38: #{tpu_custom_call.1} parent=35 // pred_check_branch
          %898 = sbr.rel (%p896) target = $region40
        $region39: #{tpu_custom_call.1} parent=35 // pred_region
          %s900 = ssub.s32 128, 128
          %901 = vsyncadd %s892, %s900
          %s902 = smul.addr %s18, 128
          %s903 = scalar_lea.hbm %s4, %s902
          %s905 = sshll.u32 %s895, 4
          %s906 = int_to_ptr.vmem [resolvable:$true] %s905
          %908 = dma.vmem_to_hbm [thread:$0]  %s906, 128, %s903, %s892
        $region40: #{tpu_custom_call.1} parent=35 // pred_fallthru
          _
      $region36: #{tpu_custom_call.1} parent=5 // pred_fallthru
        _
      %p909 = scmp.le.s32.totalorder 2, %s13
      // Predicated region
      $region41: #{tpu_custom_call.1} parent=5 // pred_check
        %p910 = pneg %p909
      $region42: #{tpu_custom_call.1} parent=5 // pred_check_branch
        %912 = sbr.rel (%p910) target = $region44
      $region43: #{tpu_custom_call.1} parent=5 // pred_region
        %s913 = ssub.s32 %s13, 2
        // Predicated region
        $region45: #{tpu_custom_call.1} parent=43 // pred_check
          %p914 = pneg %p136
        $region46: #{tpu_custom_call.1} parent=43 // pred_check_branch
          %916 = sbr.rel (%p914) target = $region48
        $region47: #{tpu_custom_call.1} parent=43 // pred_region
          %s917 = sand.u32 %s121, 1
          %s918 = scalar_lea.sflag [#allocation3], %s917
          %s919 = sand.u32 %s121, 1
          %s920 = smul.addr %s919, 8
          %s921 = scalar_lea.vmem [#allocation2], %s920
          %922 = dma.done %s918, 128
        $region48: #{tpu_custom_call.1} parent=43 // pred_fallthru
          _
      $region44: #{tpu_custom_call.1} parent=5 // pred_fallthru
        _
    $region6: #{tpu_custom_call.1} parent=1 // loop_footer
      %s17 = sadd.s32 1, %s13
    $region7: #{tpu_custom_call.1} parent=1 // loop_footer_branch
      %12 = sbr.rel target = $region3
    $region8: #{tpu_custom_call.1} parent=1 // loop_exit
      _
    %923 = vsyncpa [#allocation3], 1
    %s924 = scalar_lea.sflag [#allocation3], 1
    %925 = vsyncpa %s924, 1

// kernel: tpu_custom_call.1
$region0: #{tpu_custom_call.1}
  #allocation0 [shape = 'u32[]', space=smem, size = 0x4, offset = 0x4, fixed_abs, tag = 'smem constant byte address 0x4 - core index']
  #allocation1 [shape = 'u32[144,128]{1,0:T(1,128)}', space=vmem, size = 0x12000, scoped, tag = 'internal scratch']
  %s0 = inlined_call_operand.vmem [shape: bf16[128,32], index: 0, kind: input, shape index: {}]
  %s1 = inlined_call_operand.vmem [shape: f32[16,8,1], index: 1, kind: input, shape index: {}]
  %s2 = inlined_call_operand.vmem [shape: bf16[32,128], index: 2, kind: input, shape index: {}]
  %s3 = inlined_call_operand.vmem [shape: bf16[32,128], index: 3, kind: input, shape index: {}]
  %s4 = inlined_call_operand.hbm [shape: f32[16,128], index: 4, kind: output, shape index: {}]
  %s5 = sld [smem:[#allocation0]]
  $region49: #{tpu_custom_call.1} parent=0
    _
  %s7 = ssub.s32 1, %s5
  %s8 = scalar_select 0, %s7, %s5
  $region1: #{tpu_custom_call.1} parent=0
    #allocation2 [shape = 'u8[8192]{0}', space=vmem, size = 0x2000, scoped, tag = 'output window, operand 0']
    #allocation3 [shape = 's32[2]{0}', space=sflag, size = 0x8, scoped, tag = 'scoped memory for tpu_custom_call.1']
    %9 = vsyncpa [#allocation3], 0
    %s10 = scalar_lea.sflag [#allocation3], 1
    %11 = vsyncpa %s10, 0
    loop: start=0, step=1, limit=4
    $region2: #{tpu_custom_call.1} parent=1 // loop_pre_header
      _
    $region3: #{tpu_custom_call.1} parent=1 // loop_header
      %s13 = sphi 0, %s17
      %p14 = scmp.ge.s32.totalorder %s13, 4
      %s23 = sphi 0, %s25
      %s26 = sphi 0, %s23
      %s27 = sphi 0, %s26
      %s43 = sphi 0, %s27
      %s49 = sphi 0, %s51
      %s52 = sphi 0, %s49
      %s53 = sphi 0, %s52
      %s69 = sphi 0, %s53
      %s73 = sphi 0, %s73
      %s75 = sphi 0, %s73
      %s76 = sphi 0, %s75
      %s90 = sphi 0, %s76
      %s94 = sphi 0, %s94
      %s96 = sphi 0, %s94
      %s97 = sphi 0, %s96
      %s111 = sphi 0, %s97
      %s117 = sphi 0, %s119
      %s120 = sphi 0, %s117
      %s121 = sphi 0, %s120
      %s137 = sphi 0, %s121
    $region4: #{tpu_custom_call.1} parent=1 // loop_header_branch
      %16 = sbr.rel (%p14) target = $region8
    $region5: #{tpu_custom_call.1} parent=1 // loop_body
      %s18 = ssub.s32 %s13, 1
      %s19 = ssub.s32 %s13, 2
      %s20 = sadd.s32 %s13, 1
      %s21 = ssub.s32 %s13, %s20
      %p22 = scmp.eq.s32.totalorder %s21, 0
      %s24 = sadd.s32 %s23, 1
      %s25 = scalar_select %p22, %s23, %s24
      %p28 = pneg %p22
      %p29 = scmp.eq.s32.totalorder %s13, 1
      %p30 = por %p28, %p29
      %p31 = scmp.ne.s32.totalorder %s23, %s26
      %p32 = scmp.eq.s32.totalorder %s13, 0
      %p33 = por %p31, %p32
      %p34 = scmp.ne.s32.totalorder %s23, %s26
      %p35 = scmp.eq.s32.totalorder %s18, 1
      %p36 = por %p34, %p35
      %p37 = scmp.ne.s32.totalorder %s26, %s27
      %p38 = scmp.eq.s32.totalorder %s18, 0
      %p39 = por %p37, %p38
      %p40 = scmp.ne.s32.totalorder %s26, %s27
      %p41 = scmp.eq.s32.totalorder %s19, 1
      %p42 = por %p40, %p41
      %p44 = scmp.ne.s32.totalorder %s27, %s43
      %p45 = scmp.eq.s32.totalorder %s19, 0
      %p46 = por %p44, %p45
      %s47 = ssub.s32 %s13, %s20
      %p48 = scmp.eq.s32.totalorder %s47, 0
      %s50 = sadd.s32 %s49, 1
      %s51 = scalar_select %p48, %s49, %s50
      %p54 = pneg %p48
      %p55 = scmp.eq.s32.totalorder %s13, 1
      %p56 = por %p54, %p55
      %p57 = scmp.ne.s32.totalorder %s49, %s52
      %p58 = scmp.eq.s32.totalorder %s13, 0
      %p59 = por %p57, %p58
      %p60 = scmp.ne.s32.totalorder %s49, %s52
      %p61 = scmp.eq.s32.totalorder %s18, 1
      %p62 = por %p60, %p61
      %p63 = scmp.ne.s32.totalorder %s52, %s53
      %p64 = scmp.eq.s32.totalorder %s18, 0
      %p65 = por %p63, %p64
      %p66 = scmp.ne.s32.totalorder %s52, %s53
      %p67 = scmp.eq.s32.totalorder %s19, 1
      %p68 = por %p66, %p67
      %p70 = scmp.ne.s32.totalorder %s53, %s69
      %p71 = scmp.eq.s32.totalorder %s19, 0
      %p72 = por %p70, %p71
      %s74 = sadd.s32 %s73, 1
      %p77 = scmp.eq.s32.totalorder %s13, 1
      %p78 = scmp.ne.s32.totalorder %s73, %s75
      %p79 = scmp.eq.s32.totalorder %s13, 0
      %p80 = por %p78, %p79
      %p81 = scmp.ne.s32.totalorder %s73, %s75
      %p82 = scmp.eq.s32.totalorder %s18, 1
      %p83 = por %p81, %p82
      %p84 = scmp.ne.s32.totalorder %s75, %s76
      %p85 = scmp.eq.s32.totalorder %s18, 0
      %p86 = por %p84, %p85
      %p87 = scmp.ne.s32.totalorder %s75, %s76
      %p88 = scmp.eq.s32.totalorder %s19, 1
      %p89 = por %p87, %p88
      %p91 = scmp.ne.s32.totalorder %s76, %s90
      %p92 = scmp.eq.s32.totalorder %s19, 0
      %p93 = por %p91, %p92
      %s95 = sadd.s32 %s94, 1
      %p98 = scmp.eq.s32.totalorder %s13, 1
      %p99 = scmp.ne.s32.totalorder %s94, %s96
      %p100 = scmp.eq.s32.totalorder %s13, 0
      %p101 = por %p99, %p100
      %p102 = scmp.ne.s32.totalorder %s94, %s96
      %p103 = scmp.eq.s32.totalorder %s18, 1
      %p104 = por %p102, %p103
      %p105 = scmp.ne.s32.totalorder %s96, %s97
      %p106 = scmp.eq.s32.totalorder %s18, 0
      %p107 = por %p105, %p106
      %p108 = scmp.ne.s32.totalorder %s96, %s97
      %p109 = scmp.eq.s32.totalorder %s19, 1
      %p110 = por %p108, %p109
      %p112 = scmp.ne.s32.totalorder %s97, %s111
      %p113 = scmp.eq.s32.totalorder %s19, 0
      %p114 = por %p112, %p113
      %s115 = ssub.s32 %s13, %s20
      %p116 = scmp.eq.s32.totalorder %s115, 0
      %s118 = sadd.s32 %s117, 1
      %s119 = scalar_select %p116, %s117, %s118
      %p122 = pneg %p116
      %p123 = scmp.eq.s32.totalorder %s13, 1
      %p124 = por %p122, %p123
      %p125 = scmp.ne.s32.totalorder %s117, %s120
      %p126 = scmp.eq.s32.totalorder %s13, 0
      %p127 = por %p125, %p126
      %p128 = scmp.ne.s32.totalorder %s117, %s120
      %p129 = scmp.eq.s32.totalorder %s18, 1
      %p130 = por %p128, %p129
      %p131 = scmp.ne.s32.totalorder %s120, %s121
      %p132 = scmp.eq.s32.totalorder %s18, 0
      %p133 = por %p131, %p132
      %p134 = scmp.ne.s32.totalorder %s120, %s121
      %p135 = scmp.eq.s32.totalorder %s19, 1
      %p136 = por %p134, %p135
      %p138 = scmp.ne.s32.totalorder %s121, %s137
      %p139 = scmp.eq.s32.totalorder %s19, 0
      %p140 = por %p138, %p139
      %p141 = scmp.le.s32.totalorder 1, %s13
      %p142 = scmp.lt.s32.totalorder %s13, 3
      %p143 = pnand %p141, %p142
      %p144 = pneg %p143
      // Predicated region
      $region9: #{tpu_custom_call.1} parent=5 // pred_check
        _
      $region10: #{tpu_custom_call.1} parent=5 // pred_check_branch
        %146 = sbr.rel (%p143) target = $region12
      $region11: #{tpu_custom_call.1} parent=5 // pred_region
        %s147 = ssub.s32 %s13, 1
        // Predicated region
        $region13: #{tpu_custom_call.1} parent=11 // pred_check
          %p148 = pneg %p86
        $region14: #{tpu_custom_call.1} parent=11 // pred_check_branch
          %150 = sbr.rel (%p148) target = $region16
        $region15: #{tpu_custom_call.1} parent=11 // pred_region
          _
        $region16: #{tpu_custom_call.1} parent=11 // pred_fallthru
          _
        // Predicated region
        $region17: #{tpu_custom_call.1} parent=11 // pred_check
          %p151 = pneg %p107
        $region18: #{tpu_custom_call.1} parent=11 // pred_check_branch
          %153 = sbr.rel (%p151) target = $region20
        $region19: #{tpu_custom_call.1} parent=11 // pred_region
          _
        $region20: #{tpu_custom_call.1} parent=11 // pred_fallthru
          _
      $region12: #{tpu_custom_call.1} parent=5 // pred_fallthru
        _
      %p154 = scmp.lt.s32.totalorder %s13, 2
      // Predicated region
      $region21: #{tpu_custom_call.1} parent=5 // pred_check
        %p155 = pneg %p154
      $region22: #{tpu_custom_call.1} parent=5 // pred_check_branch
        %157 = sbr.rel (%p155) target = $region24
      $region23: #{tpu_custom_call.1} parent=5 // pred_region
        // Predicated region
        $region25: #{tpu_custom_call.1} parent=23 // pred_check
          %p158 = pneg %p33
        $region26: #{tpu_custom_call.1} parent=23 // pred_check_branch
          %160 = sbr.rel (%p158) target = $region28
        $region27: #{tpu_custom_call.1} parent=23 // pred_region
          %s161 = smul.u32 8, %s13
          %p162 = scmp.lt.s32.totalorder %s161, 15
          %s163 = scalar_select %p162, %s161, 15
          %s164 = smul.addr %s163, 4
          %s165 = scalar_lea.vmem %s0, %s164
          %s166 = smul.u32 8, %s13
        $region28: #{tpu_custom_call.1} parent=23 // pred_fallthru
          _
        // Predicated region
        $region29: #{tpu_custom_call.1} parent=23 // pred_check
          %p167 = pneg %p59
        $region30: #{tpu_custom_call.1} parent=23 // pred_check_branch
          %169 = sbr.rel (%p167) target = $region32
        $region31: #{tpu_custom_call.1} parent=23 // pred_region
          %s170 = smul.u32 8, %s13
          %p171 = scmp.lt.s32.totalorder %s170, 15
          %s172 = scalar_select %p171, %s170, 15
          %s173 = smul.addr %s172, 8
          %s174 = scalar_lea.vmem %s1, %s173
          %s175 = smul.u32 8, %s13
        $region32: #{tpu_custom_call.1} parent=23 // pred_fallthru
          _
      $region24: #{tpu_custom_call.1} parent=5 // pred_fallthru
        _
      %p176 = scmp.le.s32.totalorder 1, %s13
      %p177 = scmp.lt.s32.totalorder %s13, 3
      %p178 = pnand %p176, %p177
      %p179 = pneg %p178
      // Predicated region
      $region33: #{tpu_custom_call.1} parent=5 // pred_check
        _
      $region34: #{tpu_custom_call.1} parent=5 // pred_check_branch
        %181 = sbr.rel (%p178) target = $region36
      $region35: #{tpu_custom_call.1} parent=5 // pred_region
        %s182 = ssub.s32 %s13, 1
        %s183 = smul.u32 8, %s18
        %p184 = scmp.lt.s32.totalorder %s183, 15
        %s185 = scalar_select %p184, %s183, 15
        %s186 = smul.addr %s185, 4
        %s187 = scalar_lea.vmem %s0, %s186
        %p188 = pneg %p39
        %p189 = pneg %p36
        %s190 = smul.u32 8, %s18
        %p191 = scmp.lt.s32.totalorder %s190, 15
        %s192 = scalar_select %p191, %s190, 15
        %s193 = smul.addr %s192, 8
        %s194 = scalar_lea.vmem %s1, %s193
        %p195 = pneg %p65
        %p196 = pneg %p62
        %p197 = pneg %p86
        %p198 = pneg %p83
        %p199 = pneg %p107
        %p200 = pneg %p104
        %p201 = pneg %p133
        %p202 = pneg %p130
        %s203 = sand.u32 %s120, 1
        %s204 = scalar_lea.sflag [#allocation3], %s203
        %s205 = sand.u32 %s120, 1
        %s206 = smul.addr %s205, 8
        %s207 = scalar_lea.vmem [#allocation2], %s206
        %s208 = smul.u32 8, %s18
        %p209 = scmp.lt.s32.totalorder %s208, 15
        %s210 = scalar_select %p209, %s208, 15
        %s211 = smul.addr %s210, 4
        %s212 = scalar_lea.vmem %s0, %s211
        %s213 = smul.u32 8, %s18
        %s214 = smul.u32 8, %s18
        %p215 = scmp.lt.s32.totalorder %s214, 15
        %s216 = scalar_select %p215, %s214, 15
        %s217 = smul.addr %s216, 8
        %s218 = scalar_lea.vmem %s1, %s217
        %s219 = smul.u32 8, %s18
        %v221 = vld [vmem:[%s212] sm:$0xf]
        %v222 = vld [vmem:[%s212 + $0x4] sm:$0xf]
        %v223 = vld [vmem:[%s212 + $0x8] sm:$0xf]
        %v224 = vld [vmem:[%s212 + $0xc] sm:$0xf]
        %v225 = vld [vmem:[%s212 + $0x10] sm:$0xf]
        %v226 = vld [vmem:[%s212 + $0x14] sm:$0xf]
        %v227 = vld [vmem:[%s212 + $0x18] sm:$0xf]
        %v228 = vld [vmem:[%s212 + $0x1c] sm:$0xf]
        %v229 = vld [vmem:[%s2] sm:$0xf]
        %v230 = vld [vmem:[%s2 + $0x4] sm:$0xf]
        %v231 = vld [vmem:[%s2 + $0x8] sm:$0xf]
        %v232 = vld [vmem:[%s2 + $0xc] sm:$0xf]
        %v241 = vunpack.c.l.b16 %v221
        %v242 = vunpack.c.l.b16 %v222
        %v243 = vunpack.c.l.b16 %v223
        %v244 = vunpack.c.l.b16 %v224
        %v245 = vunpack.c.l.b16 %v225
        %v246 = vunpack.c.l.b16 %v226
        %v247 = vunpack.c.l.b16 %v227
        %v248 = vunpack.c.l.b16 %v228
        %v249 = vpack.c.b16 %v242, %v241
        %v250 = vpack.c.b16 %v244, %v243
        %v251 = vpack.c.b16 %v246, %v245
        %v252 = vpack.c.b16 %v248, %v247
        %v257 = vunpack.c.l.b16 %v229
        %v258 = vunpack.c.l.b16 %v230
        %v259 = vunpack.c.l.b16 %v231
        %v260 = vunpack.c.l.b16 %v232
        %v261 = vpack.c.b16 %v258, %v257
        %v262 = vpack.c.b16 %v260, %v259
        %vm265 = vcmask 261120
        %v267 = vsel %vm265, %v249, 0
        %v270 = vsel %vm265, %v250, 0
        %v273 = vsel %vm265, %v251, 0
        %v276 = vsel %vm265, %v252, 0
        %278 = vmatprep.subr.bf16.mxu0 0
        %279 = vmatpush1.bf16.msra.mxu0 %v261
        %280 = vmatprep.subr.bf16.mxu0 0
        %281 = vmatpush1.bf16.msra.mxu0 %v262
        %282 = vmatprep.subr.bf16.mxu0 0
        %283 = vmatpush1.bf16.msra.mxu0 0
        %284 = vmatprep.subr.bf16.mxu0 0
        %285 = vmatpush1.bf16.msra.mxu0 0
        %286 = vmatprep.subr.bf16.mxu0 0
        %287 = vmatpush1.bf16.msra.mxu0 0
        %288 = vmatprep.subr.bf16.mxu0 0
        %289 = vmatpush1.bf16.msra.mxu0 0
        %290 = vmatprep.subr.bf16.mxu0 0
        %291 = vmatpush1.bf16.msra.mxu0 0
        %292 = vmatprep.subr.bf16.mxu0 0
        %293 = vmatpush1.bf16.msra.mxu0 0
        %294 = vmatprep.subr.bf16.mxu0 0
        %295 = vmatpush1.bf16.msra.mxu0 0
        %296 = vmatprep.subr.bf16.mxu0 0
        %297 = vmatpush1.bf16.msra.mxu0 0
        %298 = vmatprep.subr.bf16.mxu0 0
        %299 = vmatpush1.bf16.msra.mxu0 0
        %300 = vmatprep.subr.bf16.mxu0 0
        %301 = vmatpush1.bf16.msra.mxu0 0
        %302 = vmatprep.subr.bf16.mxu0 0
        %303 = vmatpush1.bf16.msra.mxu0 0
        %304 = vmatprep.subr.bf16.mxu0 0
        %305 = vmatpush1.bf16.msra.mxu0 0
        %306 = vmatprep.subr.bf16.mxu0 0
        %307 = vmatpush1.bf16.msra.mxu0 0
        %308 = vmatprep.subr.bf16.mxu0 0
        %309 = vmatpush1.bf16.msra.mxu0 0
        %310 = vmatprep.mubr.bf16.mxu0 0
        %311 = vmatmul.mubr.bf16.gmra.mrb[0].mxu0 %v267
        %v312 = vpop.f32.mrb[0].mxu0
        %v313 = vadd.f32 0.0, %v312
        %v314 = vpop.f32.mrb[0].mxu0
        %v315 = vpop.f32.mrb[0].mxu0
        %v316 = vadd.f32 0.0, %v315
        %v317 = vpop.f32.mrb[0].mxu0
        %318 = vmatprep.mubr.bf16.mxu0 0
        %319 = vmatmul.mubr.bf16.gmra.mrb[0].mxu0 %v270
        %v320 = vpop.f32.mrb[0].mxu0
        %v321 = vadd.f32 0.0, %v320
        %v322 = vpop.f32.mrb[0].mxu0
        %v323 = vpop.f32.mrb[0].mxu0
        %v324 = vadd.f32 0.0, %v323
        %v325 = vpop.f32.mrb[0].mxu0
        %326 = vmatprep.mubr.bf16.mxu0 0
        %327 = vmatmul.mubr.bf16.gmra.mrb[0].mxu0 %v273
        %v328 = vpop.f32.mrb[0].mxu0
        %v329 = vadd.f32 0.0, %v328
        %v330 = vpop.f32.mrb[0].mxu0
        %v331 = vpop.f32.mrb[0].mxu0
        %v332 = vadd.f32 0.0, %v331
        %v333 = vpop.f32.mrb[0].mxu0
        %334 = vmatprep.mubr.bf16.mxu0 0
        %335 = vmatmul.mubr.bf16.gmra.mrb[0].mxu0 %v276
        %v336 = vpop.f32.mrb[0].mxu0
        %v337 = vadd.f32 0.0, %v336
        %v338 = vpop.f32.mrb[0].mxu0
        %v339 = vpop.f32.mrb[0].mxu0
        %v340 = vadd.f32 0.0, %v339
        %v341 = vpop.f32.mrb[0].mxu0
        %342 = vdwg.mxu0
        %v343 = vmax.f32 %v313, 0.0
        %v344 = vmax.f32 %v316, 0.0
        %v345 = vmax.f32 %v321, 0.0
        %v346 = vmax.f32 %v324, 0.0
        %v347 = vmax.f32 %v329, 0.0
        %v348 = vmax.f32 %v332, 0.0
        %v349 = vmax.f32 %v337, 0.0
        %v350 = vmax.f32 %v340, 0.0
        %v351 = vxor.u32 %v313, 2147483648
        %v352 = vxor.u32 %v316, 2147483648
        %v353 = vxor.u32 %v321, 2147483648
        %v354 = vxor.u32 %v324, 2147483648
        %v355 = vxor.u32 %v329, 2147483648
        %v356 = vxor.u32 %v332, 2147483648
        %v357 = vxor.u32 %v337, 2147483648
        %v358 = vxor.u32 %v340, 2147483648
        %v359 = vmul.f32 %v351, 1.442695
        %v360 = vpow.pop %v359
        %v361 = vmul.f32 %v352, 1.442695
        %v362 = vpow.pop %v361
        %v363 = vmul.f32 %v353, 1.442695
        %v364 = vpow.pop %v363
        %v365 = vmul.f32 %v354, 1.442695
        %v366 = vpow.pop %v365
        %v367 = vmul.f32 %v355, 1.442695
        %v368 = vpow.pop %v367
        %v369 = vmul.f32 %v356, 1.442695
        %v370 = vpow.pop %v369
        %v371 = vmul.f32 %v357, 1.442695
        %v372 = vpow.pop %v371
        %v373 = vmul.f32 %v358, 1.442695
        %v374 = vpow.pop %v373
        %v375 = vadd.f32 %v360, 1.0
        %v376 = vadd.f32 %v362, 1.0
        %v377 = vadd.f32 %v364, 1.0
        %v378 = vadd.f32 %v366, 1.0
        %v379 = vadd.f32 %v368, 1.0
        %v380 = vadd.f32 %v370, 1.0
        %v381 = vadd.f32 %v372, 1.0
        %v382 = vadd.f32 %v374, 1.0
        %v383 = vrcp.pop %v375
        %v384 = vmul.f32 1.0, %v383
        %v385 = vrcp.pop %v376
        %v386 = vmul.f32 1.0, %v385
        %v387 = vrcp.pop %v377
        %v388 = vmul.f32 1.0, %v387
        %v389 = vrcp.pop %v378
        %v390 = vmul.f32 1.0, %v389
        %v391 = vrcp.pop %v379
        %v392 = vmul.f32 1.0, %v391
        %v393 = vrcp.pop %v380
        %v394 = vmul.f32 1.0, %v393
        %v395 = vrcp.pop %v381
        %v396 = vmul.f32 1.0, %v395
        %v397 = vrcp.pop %v382
        %v398 = vmul.f32 1.0, %v397
        %v399 = vld [vmem:[%s218] sm:$0xff]
        %v400 = vld [vmem:[%s218 + $0x8] sm:$0xff]
        %v401 = vld [vmem:[%s218 + $0x10] sm:$0xff]
        %v402 = vld [vmem:[%s218 + $0x18] sm:$0xff]
        %v403 = vld [vmem:[%s218 + $0x20] sm:$0xff]
        %v404 = vld [vmem:[%s218 + $0x28] sm:$0xff]
        %v405 = vld [vmem:[%s218 + $0x30] sm:$0xff]
        %v406 = vld [vmem:[%s218 + $0x38] sm:$0xff]
        %vm407 = vcmask 7168
        %v408 = vsel %vm407, %v399, 0.0
        %v409 = vrot.slane %v408, 4
        %v410 = vadd.f32 %v408, %v409
        %v411 = vrot.slane %v410, 2
        %v412 = vadd.f32 %v410, %v411
        %v413 = vrot.slane %v412, 1
        %v414 = vadd.f32 %v412, %v413
        %v415 = vsel %vm407, %v400, 0.0
        %v416 = vrot.slane %v415, 4
        %v417 = vadd.f32 %v415, %v416
        %v418 = vrot.slane %v417, 2
        %v419 = vadd.f32 %v417, %v418
        %v420 = vrot.slane %v419, 1
        %v421 = vadd.f32 %v419, %v420
        %v422 = vsel %vm407, %v401, 0.0
        %v423 = vrot.slane %v422, 4
        %v424 = vadd.f32 %v422, %v423
        %v425 = vrot.slane %v424, 2
        %v426 = vadd.f32 %v424, %v425
        %v427 = vrot.slane %v426, 1
        %v428 = vadd.f32 %v426, %v427
        %v429 = vsel %vm407, %v402, 0.0
        %v430 = vrot.slane %v429, 4
        %v431 = vadd.f32 %v429, %v430
        %v432 = vrot.slane %v431, 2
        %v433 = vadd.f32 %v431, %v432
        %v434 = vrot.slane %v433, 1
        %v435 = vadd.f32 %v433, %v434
        %v436 = vsel %vm407, %v403, 0.0
        %v437 = vrot.slane %v436, 4
        %v438 = vadd.f32 %v436, %v437
        %v439 = vrot.slane %v438, 2
        %v440 = vadd.f32 %v438, %v439
        %v441 = vrot.slane %v440, 1
        %v442 = vadd.f32 %v440, %v441
        %v443 = vsel %vm407, %v404, 0.0
        %v444 = vrot.slane %v443, 4
        %v445 = vadd.f32 %v443, %v444
        %v446 = vrot.slane %v445, 2
        %v447 = vadd.f32 %v445, %v446
        %v448 = vrot.slane %v447, 1
        %v449 = vadd.f32 %v447, %v448
        %v450 = vsel %vm407, %v405, 0.0
        %v451 = vrot.slane %v450, 4
        %v452 = vadd.f32 %v450, %v451
        %v453 = vrot.slane %v452, 2
        %v454 = vadd.f32 %v452, %v453
        %v455 = vrot.slane %v454, 1
        %v456 = vadd.f32 %v454, %v455
        %v457 = vsel %vm407, %v406, 0.0
        %v458 = vrot.slane %v457, 4
        %v459 = vadd.f32 %v457, %v458
        %v460 = vrot.slane %v459, 2
        %v461 = vadd.f32 %v459, %v460
        %v462 = vrot.slane %v461, 1
        %v463 = vadd.f32 %v461, %v462
        %v464 = vsub.f32 %v399, 1.0
        %v465 = vsub.f32 %v400, 1.0
        %v466 = vsub.f32 %v401, 1.0
        %v467 = vsub.f32 %v402, 1.0
        %v468 = vsub.f32 %v403, 1.0
        %v469 = vsub.f32 %v404, 1.0
        %v470 = vsub.f32 %v405, 1.0
        %v471 = vsub.f32 %v406, 1.0
        %v472 = vmul.f32 %v464, 1e+09
        %v473 = vmul.f32 %v465, 1e+09
        %v474 = vmul.f32 %v466, 1e+09
        %v475 = vmul.f32 %v467, 1e+09
        %v476 = vmul.f32 %v468, 1e+09
        %v477 = vmul.f32 %v469, 1e+09
        %v478 = vmul.f32 %v470, 1e+09
        %v479 = vmul.f32 %v471, 1e+09
        %488 = vrot.lane.b32.xlu0 %v384, 96
        %v489 = vpop.permute.xlu0 %488
        %490 = vrot.lane.b32.xlu0 %v386, 96
        %v491 = vpop.permute.xlu0 %490
        %492 = vrot.lane.b32.xlu0 %v388, 96
        %v493 = vpop.permute.xlu0 %492
        %494 = vrot.lane.b32.xlu0 %v390, 96
        %v495 = vpop.permute.xlu0 %494
        %496 = vrot.lane.b32.xlu0 %v392, 96
        %v497 = vpop.permute.xlu0 %496
        %498 = vrot.lane.b32.xlu0 %v394, 96
        %v499 = vpop.permute.xlu0 %498
        %500 = vrot.lane.b32.xlu0 %v396, 96
        %v501 = vpop.permute.xlu0 %500
        %502 = vrot.lane.b32.xlu0 %v398, 96
        %v503 = vpop.permute.xlu0 %502
        %v512 = vmul.f32 %v399, %v489
        %v513 = vmul.f32 %v400, %v491
        %v514 = vmul.f32 %v401, %v493
        %v515 = vmul.f32 %v402, %v495
        %v516 = vmul.f32 %v403, %v497
        %v517 = vmul.f32 %v404, %v499
        %v518 = vmul.f32 %v405, %v501
        %v519 = vmul.f32 %v406, %v503
        %521 = vset.pattern.permute.xlu0 0
        %522 = vperm.xlu0 %521, %v512
        %v523 = vpop.permute.xlu0 %522
        %526 = vset.pattern.permute.xlu0 0
        %527 = vperm.xlu0 %526, %v513
        %v528 = vpop.permute.xlu0 %527
        %531 = vset.pattern.permute.xlu0 0
        %532 = vperm.xlu0 %531, %v514
        %v533 = vpop.permute.xlu0 %532
        %536 = vset.pattern.permute.xlu0 0
        %537 = vperm.xlu0 %536, %v515
        %v538 = vpop.permute.xlu0 %537
        %541 = vset.pattern.permute.xlu0 0
        %542 = vperm.xlu0 %541, %v516
        %v543 = vpop.permute.xlu0 %542
        %546 = vset.pattern.permute.xlu0 0
        %547 = vperm.xlu0 %546, %v517
        %v548 = vpop.permute.xlu0 %547
        %551 = vset.pattern.permute.xlu0 0
        %552 = vperm.xlu0 %551, %v518
        %v553 = vpop.permute.xlu0 %552
        %556 = vset.pattern.permute.xlu0 0
        %557 = vperm.xlu0 %556, %v519
        %v558 = vpop.permute.xlu0 %557
        %v560 = vmul.f32 %v523, %v343
        %v561 = vmul.f32 %v528, %v344
        %v562 = vmul.f32 %v533, %v345
        %v563 = vmul.f32 %v538, %v346
        %v564 = vmul.f32 %v543, %v347
        %v565 = vmul.f32 %v548, %v348
        %v566 = vmul.f32 %v553, %v349
        %v567 = vmul.f32 %v558, %v350
        %v568 = vsel %vm265, %v560, 0.0
        %v569 = vrot.slane %v568, 4
        %v570 = vadd.f32 %v568, %v569
        %v571 = vrot.slane %v570, 2
        %v572 = vadd.f32 %v570, %v571
        %v573 = vrot.slane %v572, 1
        %v574 = vadd.f32 %v572, %v573
        %v575 = vsel %vm265, %v561, 0.0
        %v576 = vrot.slane %v575, 4
        %v577 = vadd.f32 %v575, %v576
        %v578 = vrot.slane %v577, 2
        %v579 = vadd.f32 %v577, %v578
        %v580 = vrot.slane %v579, 1
        %v581 = vadd.f32 %v579, %v580
        %v582 = vsel %vm265, %v562, 0.0
        %v583 = vrot.slane %v582, 4
        %v584 = vadd.f32 %v582, %v583
        %v585 = vrot.slane %v584, 2
        %v586 = vadd.f32 %v584, %v585
        %v587 = vrot.slane %v586, 1
        %v588 = vadd.f32 %v586, %v587
        %v589 = vsel %vm265, %v563, 0.0
        %v590 = vrot.slane %v589, 4
        %v591 = vadd.f32 %v589, %v590
        %v592 = vrot.slane %v591, 2
        %v593 = vadd.f32 %v591, %v592
        %v594 = vrot.slane %v593, 1
        %v595 = vadd.f32 %v593, %v594
        %v596 = vsel %vm265, %v564, 0.0
        %v597 = vrot.slane %v596, 4
        %v598 = vadd.f32 %v596, %v597
        %v599 = vrot.slane %v598, 2
        %v600 = vadd.f32 %v598, %v599
        %v601 = vrot.slane %v600, 1
        %v602 = vadd.f32 %v600, %v601
        %v603 = vsel %vm265, %v565, 0.0
        %v604 = vrot.slane %v603, 4
        %v605 = vadd.f32 %v603, %v604
        %v606 = vrot.slane %v605, 2
        %v607 = vadd.f32 %v605, %v606
        %v608 = vrot.slane %v607, 1
        %v609 = vadd.f32 %v607, %v608
        %v610 = vsel %vm265, %v566, 0.0
        %v611 = vrot.slane %v610, 4
        %v612 = vadd.f32 %v610, %v611
        %v613 = vrot.slane %v612, 2
        %v614 = vadd.f32 %v612, %v613
        %v615 = vrot.slane %v614, 1
        %v616 = vadd.f32 %v614, %v615
        %v617 = vsel %vm265, %v567, 0.0
        %v618 = vrot.slane %v617, 4
        %v619 = vadd.f32 %v617, %v618
        %v620 = vrot.slane %v619, 2
        %v621 = vadd.f32 %v619, %v620
        %v622 = vrot.slane %v621, 1
        %v623 = vadd.f32 %v621, %v622
        %625 = vset.pattern.permute.xlu0 0
        %626 = vperm.xlu0 %625, %v414
        %v627 = vpop.permute.xlu0 %626
        %630 = vset.pattern.permute.xlu0 0
        %631 = vperm.xlu0 %630, %v421
        %v632 = vpop.permute.xlu0 %631
        %635 = vset.pattern.permute.xlu0 0
        %636 = vperm.xlu0 %635, %v428
        %v637 = vpop.permute.xlu0 %636
        %640 = vset.pattern.permute.xlu0 0
        %641 = vperm.xlu0 %640, %v435
        %v642 = vpop.permute.xlu0 %641
        %645 = vset.pattern.permute.xlu0 0
        %646 = vperm.xlu0 %645, %v442
        %v647 = vpop.permute.xlu0 %646
        %650 = vset.pattern.permute.xlu0 0
        %651 = vperm.xlu0 %650, %v449
        %v652 = vpop.permute.xlu0 %651
        %655 = vset.pattern.permute.xlu0 0
        %656 = vperm.xlu0 %655, %v456
        %v657 = vpop.permute.xlu0 %656
        %660 = vset.pattern.permute.xlu0 0
        %661 = vperm.xlu0 %660, %v463
        %v662 = vpop.permute.xlu0 %661
        %v664 = vrcp.pop %v627
        %v665 = vmul.f32 %v574, %v664
        %v666 = vrcp.pop %v632
        %v667 = vmul.f32 %v581, %v666
        %v668 = vrcp.pop %v637
        %v669 = vmul.f32 %v588, %v668
        %v670 = vrcp.pop %v642
        %v671 = vmul.f32 %v595, %v670
        %v672 = vrcp.pop %v647
        %v673 = vmul.f32 %v602, %v672
        %v674 = vrcp.pop %v652
        %v675 = vmul.f32 %v609, %v674
        %v676 = vrcp.pop %v657
        %v677 = vmul.f32 %v616, %v676
        %v678 = vrcp.pop %v662
        %v679 = vmul.f32 %v623, %v678
        %681 = vset.pattern.permute.xlu0 0
        %682 = vperm.xlu0 %681, %v472
        %v683 = vpop.permute.xlu0 %682
        %686 = vset.pattern.permute.xlu0 0
        %687 = vperm.xlu0 %686, %v473
        %v688 = vpop.permute.xlu0 %687
        %691 = vset.pattern.permute.xlu0 0
        %692 = vperm.xlu0 %691, %v474
        %v693 = vpop.permute.xlu0 %692
        %696 = vset.pattern.permute.xlu0 0
        %697 = vperm.xlu0 %696, %v475
        %v698 = vpop.permute.xlu0 %697
        %701 = vset.pattern.permute.xlu0 0
        %702 = vperm.xlu0 %701, %v476
        %v703 = vpop.permute.xlu0 %702
        %706 = vset.pattern.permute.xlu0 0
        %707 = vperm.xlu0 %706, %v477
        %v708 = vpop.permute.xlu0 %707
        %711 = vset.pattern.permute.xlu0 0
        %712 = vperm.xlu0 %711, %v478
        %v713 = vpop.permute.xlu0 %712
        %716 = vset.pattern.permute.xlu0 0
        %717 = vperm.xlu0 %716, %v479
        %v718 = vpop.permute.xlu0 %717
        %v720 = vadd.f32 %v560, %v683
        %v721 = vadd.f32 %v561, %v688
        %v722 = vadd.f32 %v562, %v693
        %v723 = vadd.f32 %v563, %v698
        %v724 = vadd.f32 %v564, %v703
        %v725 = vadd.f32 %v565, %v708
        %v726 = vadd.f32 %v566, %v713
        %v727 = vadd.f32 %v567, %v718
        %v728 = vsel %vm265, %v720, -inf
        %v729 = vrot.slane %v728, 4
        %v730 = vmax.f32 %v728, %v729
        %v731 = vrot.slane %v730, 2
        %v732 = vmax.f32 %v730, %v731
        %v733 = vrot.slane %v732, 1
        %v734 = vmax.f32 %v732, %v733
        %v735 = vsel %vm265, %v721, -inf
        %v736 = vrot.slane %v735, 4
        %v737 = vmax.f32 %v735, %v736
        %v738 = vrot.slane %v737, 2
        %v739 = vmax.f32 %v737, %v738
        %v740 = vrot.slane %v739, 1
        %v741 = vmax.f32 %v739, %v740
        %v742 = vsel %vm265, %v722, -inf
        %v743 = vrot.slane %v742, 4
        %v744 = vmax.f32 %v742, %v743
        %v745 = vrot.slane %v744, 2
        %v746 = vmax.f32 %v744, %v745
        %v747 = vrot.slane %v746, 1
        %v748 = vmax.f32 %v746, %v747
        %v749 = vsel %vm265, %v723, -inf
        %v750 = vrot.slane %v749, 4
        %v751 = vmax.f32 %v749, %v750
        %v752 = vrot.slane %v751, 2
        %v753 = vmax.f32 %v751, %v752
        %v754 = vrot.slane %v753, 1
        %v755 = vmax.f32 %v753, %v754
        %v756 = vsel %vm265, %v724, -inf
        %v757 = vrot.slane %v756, 4
        %v758 = vmax.f32 %v756, %v757
        %v759 = vrot.slane %v758, 2
        %v760 = vmax.f32 %v758, %v759
        %v761 = vrot.slane %v760, 1
        %v762 = vmax.f32 %v760, %v761
        %v763 = vsel %vm265, %v725, -inf
        %v764 = vrot.slane %v763, 4
        %v765 = vmax.f32 %v763, %v764
        %v766 = vrot.slane %v765, 2
        %v767 = vmax.f32 %v765, %v766
        %v768 = vrot.slane %v767, 1
        %v769 = vmax.f32 %v767, %v768
        %v770 = vsel %vm265, %v726, -inf
        %v771 = vrot.slane %v770, 4
        %v772 = vmax.f32 %v770, %v771
        %v773 = vrot.slane %v772, 2
        %v774 = vmax.f32 %v772, %v773
        %v775 = vrot.slane %v774, 1
        %v776 = vmax.f32 %v774, %v775
        %v777 = vsel %vm265, %v727, -inf
        %v778 = vrot.slane %v777, 4
        %v779 = vmax.f32 %v777, %v778
        %v780 = vrot.slane %v779, 2
        %v781 = vmax.f32 %v779, %v780
        %v782 = vrot.slane %v781, 1
        %v783 = vmax.f32 %v781, %v782
        %v784 = vadd.f32 %v665, %v734
        %v785 = vadd.f32 %v667, %v741
        %v786 = vadd.f32 %v669, %v748
        %v787 = vadd.f32 %v671, %v755
        %v788 = vadd.f32 %v673, %v762
        %v789 = vadd.f32 %v675, %v769
        %v790 = vadd.f32 %v677, %v776
        %v791 = vadd.f32 %v679, %v783
        %v792 = vpack.c.bf16 %v784, %v784
        %v793 = vpack.c.bf16 %v785, %v785
        %v794 = vpack.c.bf16 %v786, %v786
        %v795 = vpack.c.bf16 %v787, %v787
        %v796 = vpack.c.bf16 %v788, %v788
        %v797 = vpack.c.bf16 %v789, %v789
        %v798 = vpack.c.bf16 %v790, %v790
        %v799 = vpack.c.bf16 %v791, %v791
        %v800 = vld [vmem:[%s3] sm:$0xf]
        %v801 = vld [vmem:[%s3 + $0x4] sm:$0xf]
        %v802 = vld [vmem:[%s3 + $0x8] sm:$0xf]
        %v803 = vld [vmem:[%s3 + $0xc] sm:$0xf]
        %v812 = vunpack.c.l.b16 %v792
        %v813 = vunpack.c.l.b16 %v793
        %v814 = vunpack.c.l.b16 %v794
        %v815 = vunpack.c.l.b16 %v795
        %v816 = vunpack.c.l.b16 %v796
        %v817 = vunpack.c.l.b16 %v797
        %v818 = vunpack.c.l.b16 %v798
        %v819 = vunpack.c.l.b16 %v799
        %vm820 = vcmask 1041409
        %v821 = vsel %vm820, %v813, %v812
        %vm822 = vcmask 1042434
        %v823 = vsel %vm822, %v814, %v821
        %vm824 = vcmask 1043459
        %v825 = vsel %vm824, %v815, %v823
        %vm826 = vcmask 1044484
        %v827 = vsel %vm826, %v816, %v825
        %vm828 = vcmask 1045509
        %v829 = vsel %vm828, %v817, %v827
        %vm830 = vcmask 1046534
        %v831 = vsel %vm830, %v818, %v829
        %vm832 = vcmask 1047559
        %v833 = vsel %vm832, %v819, %v831
        %v834 = vpack.c.b16 %v833, %v833
        %v839 = vunpack.c.l.b16 %v800
        %v840 = vunpack.c.l.b16 %v801
        %v841 = vunpack.c.l.b16 %v802
        %v842 = vunpack.c.l.b16 %v803
        %v843 = vpack.c.b16 %v840, %v839
        %v844 = vpack.c.b16 %v842, %v841
        %v848 = vsel %vm265, %v834, 0
        %850 = vmatprep.subr.bf16.mxu0 0
        %851 = vmatpush1.bf16.msra.mxu0 %v843
        %852 = vmatprep.subr.bf16.mxu0 0
        %853 = vmatpush1.bf16.msra.mxu0 %v844
        %854 = vmatprep.subr.bf16.mxu0 0
        %855 = vmatpush1.bf16.msra.mxu0 0
        %856 = vmatprep.subr.bf16.mxu0 0
        %857 = vmatpush1.bf16.msra.mxu0 0
        %858 = vmatprep.subr.bf16.mxu0 0
        %859 = vmatpush1.bf16.msra.mxu0 0
        %860 = vmatprep.subr.bf16.mxu0 0
        %861 = vmatpush1.bf16.msra.mxu0 0
        %862 = vmatprep.subr.bf16.mxu0 0
        %863 = vmatpush1.bf16.msra.mxu0 0
        %864 = vmatprep.subr.bf16.mxu0 0
        %865 = vmatpush1.bf16.msra.mxu0 0
        %866 = vmatprep.subr.bf16.mxu0 0
        %867 = vmatpush1.bf16.msra.mxu0 0
        %868 = vmatprep.subr.bf16.mxu0 0
        %869 = vmatpush1.bf16.msra.mxu0 0
        %870 = vmatprep.subr.bf16.mxu0 0
        %871 = vmatpush1.bf16.msra.mxu0 0
        %872 = vmatprep.subr.bf16.mxu0 0
        %873 = vmatpush1.bf16.msra.mxu0 0
        %874 = vmatprep.subr.bf16.mxu0 0
        %875 = vmatpush1.bf16.msra.mxu0 0
        %876 = vmatprep.subr.bf16.mxu0 0
        %877 = vmatpush1.bf16.msra.mxu0 0
        %878 = vmatprep.subr.bf16.mxu0 0
        %879 = vmatpush1.bf16.msra.mxu0 0
        %880 = vmatprep.subr.bf16.mxu0 0
        %881 = vmatpush1.bf16.msra.mxu0 0
        %882 = vmatprep.mubr.bf16.mxu0 0
        %883 = vmatmul.mubr.bf16.gmra.mrb[0].mxu0 %v848
        %v884 = vpop.f32.mrb[0].mxu0
        %v885 = vadd.f32 0.0, %v884
        %v886 = vpop.f32.mrb[0].mxu0
        %v887 = vpop.f32.mrb[0].mxu0
        %v888 = vpop.f32.mrb[0].mxu0
        %889 = vdwg.mxu0
        %890 = vst [vmem:[%s207] sm:$0xff] %v885
        %s891 = sand.u32 %s120, 1
        %s892 = scalar_lea.sflag [#allocation3], %s891
        %s893 = sand.u32 %s120, 1
        %s894 = smul.addr %s893, 8
        %s895 = scalar_lea.vmem [#allocation2], %s894
        // Predicated region
        $region37: #{tpu_custom_call.1} parent=35 // pred_check
          %p896 = pneg %p130
        $region38: #{tpu_custom_call.1} parent=35 // pred_check_branch
          %898 = sbr.rel (%p896) target = $region40
        $region39: #{tpu_custom_call.1} parent=35 // pred_region
          %s900 = ssub.s32 128, 128
          %901 = vsyncadd %s892, %s900
          %s902 = smul.addr %s18, 128
          %s903 = scalar_lea.hbm %s4, %s902
          %s905 = sshll.u32 %s895, 4
          %s906 = int_to_ptr.vmem [resolvable:$true] %s905
          %908 = dma.vmem_to_hbm [thread:$0]  %s906, 128, %s903, %s892
        $region40: #{tpu_custom_call.1} parent=35 // pred_fallthru
          _
      $region36: #{tpu_custom_call.1} parent=5 // pred_fallthru
        _
      %p909 = scmp.le.s32.totalorder 2, %s13
      // Predicated region
      $region41: #{tpu_custom_call.1} parent=5 // pred_check
        %p910 = pneg %p909
      $region42: #{tpu_custom_call.1} parent=5 // pred_check_branch
        %912 = sbr.rel (%p910) target = $region44
      $region43: #{tpu_custom_call.1} parent=5 // pred_region
        %s913 = ssub.s32 %s13, 2
        // Predicated region
        $region45: #{tpu_custom_call.1} parent=43 // pred_check
          %p914 = pneg %p136
        $region46: #{tpu_custom_call.1} parent=43 // pred_check_branch
          %916 = sbr.rel (%p914) target = $region48
        $region47: #{tpu_custom_call.1} parent=43 // pred_region
          %s917 = sand.u32 %s121, 1
          %s918 = scalar_lea.sflag [#allocation3], %s917
          %s919 = sand.u32 %s121, 1
          %s920 = smul.addr %s919, 8
          %s921 = scalar_lea.vmem [#allocation2], %s920
          %922 = dma.done %s918, 128
        $region48: #{tpu_custom_call.1} parent=43 // pred_fallthru
          _
      $region44: #{tpu_custom_call.1} parent=5 // pred_fallthru
        _
    $region6: #{tpu_custom_call.1} parent=1 // loop_footer
      %s17 = sadd.s32 1, %s13
    $region7: #{tpu_custom_call.1} parent=1 // loop_footer_branch
      %12 = sbr.rel target = $region3
    $region8: #{tpu_custom_call.1} parent=1 // loop_exit
      _
    %923 = vsyncpa [#allocation3], 1
    %s924 = scalar_lea.sflag [#allocation3], 1
    %925 = vsyncpa %s924, 1

</llo_original>
